<compile_context>
chip_gen: v7x
topology: tpu7x:2x2x1
jax: 0.10.0
libtpu: 0.0.40
codegen_flags: <defaults>
</compile_context>

<pallas_src>
import functools

import jax
import jax.numpy as jnp
from jax.experimental import pallas as pl
from jax.experimental.pallas import tpu as pltpu

# Pin f32 matmul precision everywhere (kernel dots also pass precision=HIGHEST
# explicitly) so the 1e-5 tolerance holds on v5e/v6e/v7x alike.
jax.config.update("jax_default_matmul_precision", "highest")


# ----------------------------------------------------------------------------
# Shared epilogue: single lane-dense full-width store.
# ----------------------------------------------------------------------------
def _epilogue(y, o_ref, pad, to_real, init):
    if to_real:
        # |u|^2 in BOTH halves via an XLU lane-roll (free slot, no sub-128 stores):
        #   sq = [yr^2 | yi^2];  roll(sq, pad) = [yi^2 | yr^2];  sum = [|u|^2 | |u|^2]
        sq = y * y
        o_ref[...] = sq + pltpu.roll(sq, shift=pad, axis=1) + init
    else:
        # init_value was folded into the last layer's real-half bias in the wrapper.
        o_ref[...] = y


# ----------------------------------------------------------------------------
# Resident kernel: whole weight stack in VMEM, layers unrolled inside the body.
# ----------------------------------------------------------------------------
def _cnn_resident_kernel(*refs, n_layers, pad, to_real):
    if to_real:
        init_ref, x_ref, wb_ref, o_ref = refs
        init = init_ref[0]
    else:
        x_ref, wb_ref, o_ref = refs
        init = None

    two_pad = 2 * pad
    x = x_ref[...]
    y = x
    # Statically unrolled: n_layers is small and known at trace time.
    for l in range(n_layers):
        w = wb_ref[l, :two_pad, :]                       # packed weight (2p, 2p)
        b = wb_ref[l, two_pad:two_pad + 1, :]            # packed bias row (1, 2p)
        y = jnp.dot(x, w, preferred_element_type=jnp.float32,
                    precision=jax.lax.Precision.HIGHEST) + b
        if l + 1 < n_layers:
            x = jnp.where(y >= 0.0, y, 0.01 * y)         # complex leaky ReLU
    _epilogue(y, o_ref, pad, to_real, init)


# ----------------------------------------------------------------------------
# Streamed fallback: per-layer grid, activations resident in VMEM scratch.
# Used only when the full stack would not fit VMEM (large meta_width).
# ----------------------------------------------------------------------------
def _cnn_streamed_kernel(*refs, pad, to_real):
    if to_real:
        init_ref, x_ref, wb_ref, o_ref, act_ref = refs
        init = init_ref[0]
    else:
        x_ref, wb_ref, o_ref, act_ref = refs
        init = None

    layer = pl.program_id(0)
    n_layers = pl.num_programs(0)
    two_pad = 2 * pad

    @pl.when(layer == 0)
    def _():
        act_ref[...] = x_ref[...]

    # One merged weight+bias slab per grid step -> single streamed DMA per layer.
    # (For pad >= 128 / v7x-scale widths, streaming only [Wr^T|Wi^T] and/or an
    #  N-tiled inner grid would halve / bound the streamed bytes.)
    w = wb_ref[0, :two_pad, :]
    b = wb_ref[0, two_pad:two_pad + 1, :]
    y = jnp.dot(act_ref[...], w, preferred_element_type=jnp.float32,
                precision=jax.lax.Precision.HIGHEST) + b

    @pl.when(layer < n_layers - 1)
    def _():
        act_ref[...] = jnp.where(y >= 0.0, y, 0.01 * y)

    @pl.when(layer == n_layers - 1)
    def _():
        _epilogue(y, o_ref, pad, to_real, init)


# ----------------------------------------------------------------------------
# Wrapper: pack weights+bias once (pre-transposed), single pallas_call.
# ----------------------------------------------------------------------------
def _round_up(x, m):
    return ((x + m - 1) // m) * m


def _pack_layer(wr, wi, br, bi, pad, extra_real_bias):
    """(2*pad + 8, 2*pad) slab: rows [0:2p] packed weight, row 2p packed bias."""
    out_d, in_d = wr.shape
    two_pad = 2 * pad
    slab = jnp.zeros((two_pad + 8, two_pad), jnp.float32)
    slab = slab.at[:in_d, :out_d].set(wr.T)                     #  Wr^T
    slab = slab.at[:in_d, pad:pad + out_d].set(wi.T)            #  Wi^T
    slab = slab.at[pad:pad + in_d, :out_d].set(-wi.T)           # -Wi^T
    slab = slab.at[pad:pad + in_d, pad:pad + out_d].set(wr.T)   #  Wr^T
    slab = slab.at[two_pad, :out_d].set(br + extra_real_bias)   # bias (real)
    slab = slab.at[two_pad, pad:pad + out_d].set(bi)            # bias (imag)
    return slab


def _vmem_capacity_bytes():
    try:
        return int(pltpu.get_tpu_info().vmem_capacity_bytes)
    except Exception:
        return 64 * 1024 * 1024   # conservative: v7x per-core VMEM


def cnn_forward(params, ur, ui, init_value, to_real=False):
    layers = [params["fc0"], *params["net"], params["fc1"]]
    n_layers = len(layers)
    out_features = layers[-1]["wr"].shape[0]

    dims = [layers[0]["wr"].shape[1]] + [p["wr"].shape[0] for p in layers]
    pad = _round_up(max(dims), 64)       # packed lane width 2*pad is a multiple of 128
    two_pad = 2 * pad

    init_scalar = jnp.asarray(init_value, jnp.float32).reshape(-1)[0]

    # Pack weights + bias; fold init_value into the last real bias when the
    # output stays complex (u + init adds a real scalar to every real part).
    slabs = []
    for li, p in enumerate(layers):
        extra = init_scalar if ((not to_real) and li == n_layers - 1) else 0.0
        slabs.append(_pack_layer(p["wr"], p["wi"], p["br"], p["bi"], pad, extra))
    wb_stack = jnp.stack(slabs)                                   # (L, 2p+8, 2p)

    batch, in_d = ur.shape
    bpad = _round_up(max(batch, 8), 8)
    x_pack = jnp.zeros((bpad, two_pad), jnp.float32)
    x_pack = x_pack.at[:batch, :in_d].set(ur)
    x_pack = x_pack.at[:batch, pad:pad + in_d].set(ui)

    out_sds = jax.ShapeDtypeStruct((bpad, two_pad), jnp.float32)  # lane-dense slab

    # Generation-aware VMEM budgeting.
    wb_bytes = int(wb_stack.size) * 4
    io_bytes = (int(x_pack.size) + bpad * two_pad) * 4
    vmem_cap = _vmem_capacity_bytes()
    use_resident = 2 * (wb_bytes + io_bytes) + (1 << 20) <= int(0.75 * vmem_cap)

    cost = pl.CostEstimate(
        flops=2 * n_layers * bpad * two_pad * two_pad,
        transcendentals=0,
        bytes_accessed=wb_bytes + io_bytes + 4,
    )

    smem_specs = [pl.BlockSpec(memory_space=pltpu.MemorySpace.SMEM)] if to_real else []
    smem_args = [init_scalar.reshape((1,))] if to_real else []

    if use_resident:
        kernel = functools.partial(
            _cnn_resident_kernel, n_layers=n_layers, pad=pad, to_real=to_real)
        vmem_limit = min(vmem_cap, max(16 << 20, 2 * (wb_bytes + io_bytes) + (4 << 20)))
        out = pl.pallas_call(
            kernel,
            out_shape=out_sds,
            grid=(1,),
            in_specs=smem_specs + [
                pl.BlockSpec((bpad, two_pad), lambda i: (0, 0)),                # input
                pl.BlockSpec((n_layers, two_pad + 8, two_pad),
                             lambda i: (0, 0, 0)),                              # resident stack
            ],
            out_specs=pl.BlockSpec((bpad, two_pad), lambda i: (0, 0)),
            compiler_params=pltpu.CompilerParams(
                dimension_semantics=("arbitrary",),
                vmem_limit_bytes=int(vmem_limit),
            ),
            cost_estimate=cost,
        )(*smem_args, x_pack, wb_stack)
    else:
        # Large-width fallback: stream one merged weight+bias slab per grid step.
        kernel = functools.partial(_cnn_streamed_kernel, pad=pad, to_real=to_real)
        per_layer_bytes = (two_pad + 8) * two_pad * 4
        vmem_limit = min(vmem_cap,
                         max(16 << 20, 2 * per_layer_bytes + 3 * io_bytes + (4 << 20)))
        out = pl.pallas_call(
            kernel,
            out_shape=out_sds,
            grid=(n_layers,),
            in_specs=smem_specs + [
                pl.BlockSpec((bpad, two_pad), lambda l: (0, 0)),                # input
                pl.BlockSpec((1, two_pad + 8, two_pad), lambda l: (l, 0, 0)),   # streamed slab
            ],
            out_specs=pl.BlockSpec((bpad, two_pad), lambda l: (0, 0)),
            scratch_shapes=[pltpu.VMEM((bpad, two_pad), jnp.float32)],          # activations
            compiler_params=pltpu.CompilerParams(
                dimension_semantics=("arbitrary",),
                vmem_limit_bytes=int(vmem_limit),
            ),
            cost_estimate=cost,
        )(*smem_args, x_pack, wb_stack)

    if to_real:
        return out[:batch, :out_features]
    return out[:batch, :out_features] + 1j * out[:batch, pad:pad + out_features]


cnn_forward = jax.jit(cnn_forward, static_argnames=("to_real",))


# ----------------------------------------------------------------------------
# Parameter init (matches torch: randn/100 for W, V, b0, b1)
# ----------------------------------------------------------------------------
def init_complex_linear(key, in_dim, out_dim):
    k0, k1, k2, k3 = jax.random.split(key, 4)
    return dict(
        wr=jax.random.normal(k0, (out_dim, in_dim), jnp.float32) / 100.0,
        wi=jax.random.normal(k1, (out_dim, in_dim), jnp.float32) / 100.0,
        br=jax.random.normal(k2, (out_dim,), jnp.float32) / 100.0,
        bi=jax.random.normal(k3, (out_dim,), jnp.float32) / 100.0,
    )


def init_cnn_params(key, input_features, out_features, width, depth):
    keys = jax.random.split(key, depth + 2)
    return {
        "fc0": init_complex_linear(keys[0], input_features, width),
        "net": [init_complex_linear(keys[1 + i], width, width) for i in range(depth)],
        "fc1": init_complex_linear(keys[depth + 1], width, out_features),
    }


if __name__ == "__main__":
    batch = 8
    input_features = 16
    width = 32          # stands in for config.meta_width
    depth = 2           # stands in for config.meta_depth
    out_features = 8
    init_value = jnp.full((1,), 0.25, jnp.float32)   # non-zero to exercise the fold

    key = jax.random.PRNGKey(0)
    k_params, k_xr, k_xi = jax.random.split(key, 3)
    params = init_cnn_params(k_params, input_features, out_features, width, depth)

    ur = jax.random.normal(k_xr, (batch, input_features), jnp.float32)
    ui = jax.random.normal(k_xi, (batch, input_features), jnp.float32)

    # Pure-JAX reference of the same math.
    def ref_forward(params, ur, ui, init_value, to_real):
        u = ur + 1j * ui

        def lin(p, u):
            w = p["wr"] + 1j * p["wi"]
            b = p["br"] + 1j * p["bi"]
            return u @ w.T + b

        def act(u):
            lr = jnp.where(u.real >= 0, u.real, 0.01 * u.real)
            li = jnp.where(u.imag >= 0, u.imag, 0.01 * u.imag)
            return lr + 1j * li

        u = act(lin(params["fc0"], u))
        for p in params["net"]:
            u = act(lin(p, u))
        u = lin(params["fc1"], u)
        if to_real:
            u = jnp.abs(u) ** 2
        return u + init_value

    # Complex-output path (init folded into final real bias inside the kernel).
    out_c = jax.block_until_ready(
        cnn_forward(params, ur, ui, init_value, to_real=False))
    ref_c = ref_forward(params, ur, ui, init_value, to_real=False)
    assert jnp.allclose(out_c.real, ref_c.real, atol=1e-5), "real mismatch"
    assert jnp.allclose(out_c.imag, ref_c.imag, atol=1e-5), "imag mismatch"

    # to_real path (|u|^2 + init fused in-kernel, lane-dense epilogue).
    out_r = jax.block_until_ready(
        cnn_forward(params, ur, ui, init_value, to_real=True))
    ref_r = ref_forward(params, ur, ui, init_value, to_real=True)
    assert jnp.allclose(out_r, ref_r.real, atol=1e-5), "to_real mismatch"

    print("KERNEL_OK")
</pallas_src>

<mosaic_0001>
module attributes {stable_mosaic.version = 11 : i64} {
  func.func @_cnn_resident_kernel(%arg0: i32, %arg1: memref<8x128xf32, #tpu.memory_space<vmem>>, %arg2: memref<4x136x128xf32, #tpu.memory_space<vmem>>, %arg3: memref<8x128xf32, #tpu.memory_space<vmem>>) attributes {dimension_semantics = [#tpu.dimension_semantics<arbitrary>], iteration_bounds = array<i64: 1>, scalar_prefetch = 0 : i64, scratch_operands = 0 : i64, tpu.core_type = #tpu.core_type<tc>, window_params = [{pipeline_mode = #tpu.pipeline_mode<synchronous>, transform_indices = @transform_0, window_bounds = array<i64: 8, 128>}, {pipeline_mode = #tpu.pipeline_mode<synchronous>, transform_indices = @transform_1, window_bounds = array<i64: 4, 136, 128>}, {pipeline_mode = #tpu.pipeline_mode<synchronous>, transform_indices = @transform_2, window_bounds = array<i64: 8, 128>}]} {
    %c0 = arith.constant 0 : index
    %c0_0 = arith.constant 0 : index
    %0 = vector.load %arg1[%c0, %c0_0] : memref<8x128xf32, #tpu.memory_space<vmem>>, vector<8x128xf32>
    %c0_1 = arith.constant 0 : index
    %c0_2 = arith.constant 0 : index
    %c0_3 = arith.constant 0 : index
    %1 = vector.load %arg2[%c0_1, %c0_2, %c0_3] : memref<4x136x128xf32, #tpu.memory_space<vmem>>, vector<1x128x128xf32>
    %2 = vector.shape_cast %1 : vector<1x128x128xf32> to vector<128x128xf32>
    %c0_4 = arith.constant 0 : index
    %c128 = arith.constant 128 : index
    %c0_5 = arith.constant 0 : index
    %3 = vector.load %arg2[%c0_4, %c128, %c0_5] : memref<4x136x128xf32, #tpu.memory_space<vmem>>, vector<1x1x128xf32>
    %4 = vector.shape_cast %3 : vector<1x1x128xf32> to vector<1x128xf32>
    %cst = arith.constant dense<0.000000e+00> : vector<8x128xf32>
    %5 = tpu.matmul %0, %2, %cst {dimension_numbers = #tpu.dot_dimension_numbers<[1], [0], [0], [1], [0, 0, 1, 1], [], []>, precision = #tpu.contract_precision<fp32>} : vector<8x128xf32>, vector<128x128xf32>, vector<8x128xf32> -> vector<8x128xf32>
    %6 = vector.broadcast %4 : vector<1x128xf32> to vector<8x128xf32>
    %7 = arith.addf %5, %6 : vector<8x128xf32>
    %cst_6 = arith.constant 0.000000e+00 : f32
    %8 = vector.broadcast %cst_6 : f32 to vector<8x128xf32>
    %9 = arith.cmpf oge, %7, %8 : vector<8x128xf32>
    %cst_7 = arith.constant 0.00999999977 : f32
    %10 = vector.broadcast %cst_7 : f32 to vector<8x128xf32>
    %11 = arith.mulf %10, %7 : vector<8x128xf32>
    %12 = arith.select %9, %7, %11 : vector<8x128xi1>, vector<8x128xf32>
    %c1 = arith.constant 1 : index
    %c0_8 = arith.constant 0 : index
    %c0_9 = arith.constant 0 : index
    %13 = vector.load %arg2[%c1, %c0_8, %c0_9] : memref<4x136x128xf32, #tpu.memory_space<vmem>>, vector<1x128x128xf32>
    %14 = vector.shape_cast %13 : vector<1x128x128xf32> to vector<128x128xf32>
    %c1_10 = arith.constant 1 : index
    %c128_11 = arith.constant 128 : index
    %c0_12 = arith.constant 0 : index
    %15 = vector.load %arg2[%c1_10, %c128_11, %c0_12] : memref<4x136x128xf32, #tpu.memory_space<vmem>>, vector<1x1x128xf32>
    %16 = vector.shape_cast %15 : vector<1x1x128xf32> to vector<1x128xf32>
    %cst_13 = arith.constant dense<0.000000e+00> : vector<8x128xf32>
    %17 = tpu.matmul %12, %14, %cst_13 {dimension_numbers = #tpu.dot_dimension_numbers<[1], [0], [0], [1], [0, 0, 1, 1], [], []>, precision = #tpu.contract_precision<fp32>} : vector<8x128xf32>, vector<128x128xf32>, vector<8x128xf32> -> vector<8x128xf32>
    %18 = vector.broadcast %16 : vector<1x128xf32> to vector<8x128xf32>
    %19 = arith.addf %17, %18 : vector<8x128xf32>
    %cst_14 = arith.constant 0.000000e+00 : f32
    %20 = vector.broadcast %cst_14 : f32 to vector<8x128xf32>
    %21 = arith.cmpf oge, %19, %20 : vector<8x128xf32>
    %cst_15 = arith.constant 0.00999999977 : f32
    %22 = vector.broadcast %cst_15 : f32 to vector<8x128xf32>
    %23 = arith.mulf %22, %19 : vector<8x128xf32>
    %24 = arith.select %21, %19, %23 : vector<8x128xi1>, vector<8x128xf32>
    %c2 = arith.constant 2 : index
    %c0_16 = arith.constant 0 : index
    %c0_17 = arith.constant 0 : index
    %25 = vector.load %arg2[%c2, %c0_16, %c0_17] : memref<4x136x128xf32, #tpu.memory_space<vmem>>, vector<1x128x128xf32>
    %26 = vector.shape_cast %25 : vector<1x128x128xf32> to vector<128x128xf32>
    %c2_18 = arith.constant 2 : index
    %c128_19 = arith.constant 128 : index
    %c0_20 = arith.constant 0 : index
    %27 = vector.load %arg2[%c2_18, %c128_19, %c0_20] : memref<4x136x128xf32, #tpu.memory_space<vmem>>, vector<1x1x128xf32>
    %28 = vector.shape_cast %27 : vector<1x1x128xf32> to vector<1x128xf32>
    %cst_21 = arith.constant dense<0.000000e+00> : vector<8x128xf32>
    %29 = tpu.matmul %24, %26, %cst_21 {dimension_numbers = #tpu.dot_dimension_numbers<[1], [0], [0], [1], [0, 0, 1, 1], [], []>, precision = #tpu.contract_precision<fp32>} : vector<8x128xf32>, vector<128x128xf32>, vector<8x128xf32> -> vector<8x128xf32>
    %30 = vector.broadcast %28 : vector<1x128xf32> to vector<8x128xf32>
    %31 = arith.addf %29, %30 : vector<8x128xf32>
    %cst_22 = arith.constant 0.000000e+00 : f32
    %32 = vector.broadcast %cst_22 : f32 to vector<8x128xf32>
    %33 = arith.cmpf oge, %31, %32 : vector<8x128xf32>
    %cst_23 = arith.constant 0.00999999977 : f32
    %34 = vector.broadcast %cst_23 : f32 to vector<8x128xf32>
    %35 = arith.mulf %34, %31 : vector<8x128xf32>
    %36 = arith.select %33, %31, %35 : vector<8x128xi1>, vector<8x128xf32>
    %c3 = arith.constant 3 : index
    %c0_24 = arith.constant 0 : index
    %c0_25 = arith.constant 0 : index
    %37 = vector.load %arg2[%c3, %c0_24, %c0_25] : memref<4x136x128xf32, #tpu.memory_space<vmem>>, vector<1x128x128xf32>
    %38 = vector.shape_cast %37 : vector<1x128x128xf32> to vector<128x128xf32>
    %c3_26 = arith.constant 3 : index
    %c128_27 = arith.constant 128 : index
    %c0_28 = arith.constant 0 : index
    %39 = vector.load %arg2[%c3_26, %c128_27, %c0_28] : memref<4x136x128xf32, #tpu.memory_space<vmem>>, vector<1x1x128xf32>
    %40 = vector.shape_cast %39 : vector<1x1x128xf32> to vector<1x128xf32>
    %cst_29 = arith.constant dense<0.000000e+00> : vector<8x128xf32>
    %41 = tpu.matmul %36, %38, %cst_29 {dimension_numbers = #tpu.dot_dimension_numbers<[1], [0], [0], [1], [0, 0, 1, 1], [], []>, precision = #tpu.contract_precision<fp32>} : vector<8x128xf32>, vector<128x128xf32>, vector<8x128xf32> -> vector<8x128xf32>
    %42 = vector.broadcast %40 : vector<1x128xf32> to vector<8x128xf32>
    %43 = arith.addf %41, %42 : vector<8x128xf32>
    %c0_30 = arith.constant 0 : index
    %c0_31 = arith.constant 0 : index
    %44 = vector.load %arg3[%c0_30, %c0_31] : memref<8x128xf32, #tpu.memory_space<vmem>>, vector<8x128xf32>
    tpu.vector_store %arg3[%c0_30, %c0_31], %43 {strides = array<i32>} : memref<8x128xf32, #tpu.memory_space<vmem>>, vector<8x128xf32>,
    return
  }
  func.func @transform_0(%arg0: i32) -> (i32, i32) {
    %c0_i32 = arith.constant 0 : i32
    %c0_i32_0 = arith.constant 0 : i32
    %c0_i32_1 = arith.constant 0 : i32
    return %c0_i32, %c0_i32_0 : i32, i32
  }
  func.func @transform_1(%arg0: i32) -> (i32, i32, i32) {
    %c0_i32 = arith.constant 0 : i32
    %c0_i32_0 = arith.constant 0 : i32
    %c0_i32_1 = arith.constant 0 : i32
    %c0_i32_2 = arith.constant 0 : i32
    return %c0_i32, %c0_i32_0, %c0_i32_1 : i32, i32, i32
  }
  func.func @transform_2(%arg0: i32) -> (i32, i32) {
    %c0_i32 = arith.constant 0 : i32
    %c0_i32_0 = arith.constant 0 : i32
    %c0_i32_1 = arith.constant 0 : i32
    return %c0_i32, %c0_i32_0 : i32, i32
  }
}

</mosaic_0001>

<llo_original>
// kernel: custom-call
$region0: #{custom-call}
  %s0 = inlined_call_operand.vmem [shape: f32[8,8], index: 0, kind: input, shape index: {}]
  %s1 = inlined_call_operand.vmem [shape: f32[8,8], index: 1, kind: input, shape index: {}]
  %s2 = inlined_call_operand.hbm [shape: c64[8,8], index: 2, kind: output, shape index: {}]
  %s3 = scalar_lea.hbm %s2, 128
  $region1: #{custom-call} parent=0
    #allocation0 [shape = 's32[1]{0}', space=sflag, size = 0x4, scoped, tag = 'scoped memory for custom-call']
    %4 = vsyncpa [#allocation0], 0
    %s5 = sshll.u32 %s0, 4
    %s6 = int_to_ptr.vmem [resolvable:$true] %s5
    %8 = dma.vmem_to_hbm [thread:$0]  %s6, 128, %s2, [#allocation0]
    %9 = dma.done [#allocation0], 128
    %10 = vsyncpa [#allocation0], 1
  $region2: #{custom-call} parent=0
    #allocation1 [shape = 's32[1]{0}', space=sflag, size = 0x4, scoped, tag = 'scoped memory for custom-call']
    %11 = vsyncpa [#allocation1], 0
    %s12 = sshll.u32 %s1, 4
    %s13 = int_to_ptr.vmem [resolvable:$true] %s12
    %15 = dma.vmem_to_hbm [thread:$0]  %s13, 128, %s3, [#allocation1]
    %16 = dma.done [#allocation1], 128
    %17 = vsyncpa [#allocation1], 1

// kernel: cnn_forward.1
$region0: #{cnn_forward.1}
  #allocation0 [shape = 'u32[]', space=smem, size = 0x4, offset = 0x4, fixed_abs, tag = 'smem constant byte address 0x4 - core index']
  #allocation1 [shape = 'u32[144,128]{1,0:T(1,128)}', space=vmem, size = 0x12000, scoped, tag = 'internal scratch']
  %s0 = inlined_call_operand.vmem [shape: f32[8,128], index: 0, kind: input, shape index: {}]
  %s1 = inlined_call_operand.vmem [shape: f32[4,136,128], index: 1, kind: input, shape index: {}]
  %s2 = inlined_call_operand.vmem [shape: f32[8,128], index: 2, kind: output, shape index: {}]
  %s3 = sld [smem:[#allocation0]]
  $region18: #{cnn_forward.1} parent=0
    _
  %s5 = ssub.s32 1, %s3
  %s6 = scalar_select 0, %s5, %s3
  // Predicated region
  $region2: #{cnn_forward.1} parent=0 // pred_check
    _
  $region3: #{cnn_forward.1} parent=0 // pred_check_branch
    %8 = sbr.rel (0) target = $region5
  $region4: #{cnn_forward.1} parent=0 // pred_region
    _
  $region5: #{cnn_forward.1} parent=0 // pred_fallthru
    _
  // Predicated region
  $region6: #{cnn_forward.1} parent=0 // pred_check
    _
  $region7: #{cnn_forward.1} parent=0 // pred_check_branch
    %10 = sbr.rel (0) target = $region9
  $region8: #{cnn_forward.1} parent=0 // pred_region
    _
  $region9: #{cnn_forward.1} parent=0 // pred_fallthru
    _
  %v11 = vld [vmem:[%s0] sm:$0xff]
  %v12 = vld [vmem:[%s1] sm:$0xff]
  %v13 = vld [vmem:[%s1 + $0x8] sm:$0xff]
  %v14 = vld [vmem:[%s1 + $0x10] sm:$0xff]
  %v15 = vld [vmem:[%s1 + $0x18] sm:$0xff]
  %v16 = vld [vmem:[%s1 + $0x20] sm:$0xff]
  %v17 = vld [vmem:[%s1 + $0x28] sm:$0xff]
  %v18 = vld [vmem:[%s1 + $0x30] sm:$0xff]
  %v19 = vld [vmem:[%s1 + $0x38] sm:$0xff]
  %v20 = vld [vmem:[%s1 + $0x40] sm:$0xff]
  %v21 = vld [vmem:[%s1 + $0x48] sm:$0xff]
  %v22 = vld [vmem:[%s1 + $0x50] sm:$0xff]
  %v23 = vld [vmem:[%s1 + $0x58] sm:$0xff]
  %v24 = vld [vmem:[%s1 + $0x60] sm:$0xff]
  %v25 = vld [vmem:[%s1 + $0x68] sm:$0xff]
  %v26 = vld [vmem:[%s1 + $0x70] sm:$0xff]
  %v27 = vld [vmem:[%s1 + $0x78] sm:$0xff]
  %v28 = vld [vmem:[%s1 + $0x80] sm:$0x1]
  %v29 = vlaneseq
  %v30 = vshrl.u32 %v29, 7
  %v31 = vsub.s32 0, %v30
  %v32 = vrot.slane %v28, %v31
  %33 = vmatprep.subr.mxu0 0.0
  %v34 = vand.u32 %v12, 4294901760
  %35 = vmatpush1.msra.mxu0 %v34
  %36 = vmatprep.subr.mxu0 0.0
  %v37 = vand.u32 %v13, 4294901760
  %38 = vmatpush1.msra.mxu0 %v37
  %39 = vmatprep.subr.mxu0 0.0
  %v40 = vand.u32 %v14, 4294901760
  %41 = vmatpush1.msra.mxu0 %v40
  %42 = vmatprep.subr.mxu0 0.0
  %v43 = vand.u32 %v15, 4294901760
  %44 = vmatpush1.msra.mxu0 %v43
  %45 = vmatprep.subr.mxu0 0.0
  %v46 = vand.u32 %v16, 4294901760
  %47 = vmatpush1.msra.mxu0 %v46
  %48 = vmatprep.subr.mxu0 0.0
  %v49 = vand.u32 %v17, 4294901760
  %50 = vmatpush1.msra.mxu0 %v49
  %51 = vmatprep.subr.mxu0 0.0
  %v52 = vand.u32 %v18, 4294901760
  %53 = vmatpush1.msra.mxu0 %v52
  %54 = vmatprep.subr.mxu0 0.0
  %v55 = vand.u32 %v19, 4294901760
  %56 = vmatpush1.msra.mxu0 %v55
  %57 = vmatprep.subr.mxu0 0.0
  %v58 = vand.u32 %v20, 4294901760
  %59 = vmatpush1.msra.mxu0 %v58
  %60 = vmatprep.subr.mxu0 0.0
  %v61 = vand.u32 %v21, 4294901760
  %62 = vmatpush1.msra.mxu0 %v61
  %63 = vmatprep.subr.mxu0 0.0
  %v64 = vand.u32 %v22, 4294901760
  %65 = vmatpush1.msra.mxu0 %v64
  %66 = vmatprep.subr.mxu0 0.0
  %v67 = vand.u32 %v23, 4294901760
  %68 = vmatpush1.msra.mxu0 %v67
  %69 = vmatprep.subr.mxu0 0.0
  %v70 = vand.u32 %v24, 4294901760
  %71 = vmatpush1.msra.mxu0 %v70
  %72 = vmatprep.subr.mxu0 0.0
  %v73 = vand.u32 %v25, 4294901760
  %74 = vmatpush1.msra.mxu0 %v73
  %75 = vmatprep.subr.mxu0 0.0
  %v76 = vand.u32 %v26, 4294901760
  %77 = vmatpush1.msra.mxu0 %v76
  %78 = vmatprep.subr.mxu0 0.0
  %v79 = vand.u32 %v27, 4294901760
  %80 = vmatpush1.msra.mxu0 %v79
  %81 = vmatprep.subr.mxu0 0.0
  %82 = vmatpush1.msra.mxu0 0.0
  %83 = vmatprep.subr.mxu0 0.0
  %84 = vmatpush1.msra.mxu0 0.0
  %85 = vmatprep.subr.mxu0 0.0
  %86 = vmatpush1.msra.mxu0 0.0
  %87 = vmatprep.subr.mxu0 0.0
  %88 = vmatpush1.msra.mxu0 0.0
  %89 = vmatprep.subr.mxu0 0.0
  %90 = vmatpush1.msra.mxu0 0.0
  %91 = vmatprep.subr.mxu0 0.0
  %92 = vmatpush1.msra.mxu0 0.0
  %93 = vmatprep.subr.mxu0 0.0
  %94 = vmatpush1.msra.mxu0 0.0
  %95 = vmatprep.subr.mxu0 0.0
  %96 = vmatpush1.msra.mxu0 0.0
  %97 = vmatprep.subr.mxu0 0.0
  %98 = vmatpush1.msra.mxu0 0.0
  %99 = vmatprep.subr.mxu0 0.0
  %100 = vmatpush1.msra.mxu0 0.0
  %101 = vmatprep.subr.mxu0 0.0
  %102 = vmatpush1.msra.mxu0 0.0
  %103 = vmatprep.subr.mxu0 0.0
  %104 = vmatpush1.msra.mxu0 0.0
  %105 = vmatprep.subr.mxu0 0.0
  %106 = vmatpush1.msra.mxu0 0.0
  %107 = vmatprep.subr.mxu0 0.0
  %108 = vmatpush1.msra.mxu0 0.0
  %109 = vmatprep.subr.mxu0 0.0
  %110 = vmatpush1.msra.mxu0 0.0
  %111 = vmatprep.subr.mxu0 0.0
  %112 = vmatpush1.msra.mxu0 0.0
  %113 = vmatprep.mubr.f32.mxu0 0.0
  %v114 = vand.u32 %v11, 4294901760
  %v115 = vsub.f32 %v11, %v114
  %v116 = vand.u32 %v115, 4294901760
  %v117 = vsub.f32 %v115, %v116
  %v118 = vand.u32 %v117, 4294901760
  %119 = vmatmul.mubr.f32.gmra.mrb[0].mxu0 %v118
  %v120 = vpop.f32.mrb[0].mxu0
  %v121 = vadd.f32 %v32, %v120
  %v122 = vpop.f32.mrb[0].mxu0
  %123 = vdwg.mxu0
  %124 = vmatprep.subr.mxu0 0.0
  %v125 = vand.u32 %v12, 4294901760
  %v126 = vsub.f32 %v12, %v125
  %v127 = vand.u32 %v126, 4294901760
  %v128 = vsub.f32 %v126, %v127
  %v129 = vand.u32 %v128, 4294901760
  %130 = vmatpush1.msra.mxu0 %v129
  %131 = vmatprep.subr.mxu0 0.0
  %v132 = vand.u32 %v13, 4294901760
  %v133 = vsub.f32 %v13, %v132
  %v134 = vand.u32 %v133, 4294901760
  %v135 = vsub.f32 %v133, %v134
  %v136 = vand.u32 %v135, 4294901760
  %137 = vmatpush1.msra.mxu0 %v136
  %138 = vmatprep.subr.mxu0 0.0
  %v139 = vand.u32 %v14, 4294901760
  %v140 = vsub.f32 %v14, %v139
  %v141 = vand.u32 %v140, 4294901760
  %v142 = vsub.f32 %v140, %v141
  %v143 = vand.u32 %v142, 4294901760
  %144 = vmatpush1.msra.mxu0 %v143
  %145 = vmatprep.subr.mxu0 0.0
  %v146 = vand.u32 %v15, 4294901760
  %v147 = vsub.f32 %v15, %v146
  %v148 = vand.u32 %v147, 4294901760
  %v149 = vsub.f32 %v147, %v148
  %v150 = vand.u32 %v149, 4294901760
  %151 = vmatpush1.msra.mxu0 %v150
  %152 = vmatprep.subr.mxu0 0.0
  %v153 = vand.u32 %v16, 4294901760
  %v154 = vsub.f32 %v16, %v153
  %v155 = vand.u32 %v154, 4294901760
  %v156 = vsub.f32 %v154, %v155
  %v157 = vand.u32 %v156, 4294901760
  %158 = vmatpush1.msra.mxu0 %v157
  %159 = vmatprep.subr.mxu0 0.0
  %v160 = vand.u32 %v17, 4294901760
  %v161 = vsub.f32 %v17, %v160
  %v162 = vand.u32 %v161, 4294901760
  %v163 = vsub.f32 %v161, %v162
  %v164 = vand.u32 %v163, 4294901760
  %165 = vmatpush1.msra.mxu0 %v164
  %166 = vmatprep.subr.mxu0 0.0
  %v167 = vand.u32 %v18, 4294901760
  %v168 = vsub.f32 %v18, %v167
  %v169 = vand.u32 %v168, 4294901760
  %v170 = vsub.f32 %v168, %v169
  %v171 = vand.u32 %v170, 4294901760
  %172 = vmatpush1.msra.mxu0 %v171
  %173 = vmatprep.subr.mxu0 0.0
  %v174 = vand.u32 %v19, 4294901760
  %v175 = vsub.f32 %v19, %v174
  %v176 = vand.u32 %v175, 4294901760
  %v177 = vsub.f32 %v175, %v176
  %v178 = vand.u32 %v177, 4294901760
  %179 = vmatpush1.msra.mxu0 %v178
  %180 = vmatprep.subr.mxu0 0.0
  %v181 = vand.u32 %v20, 4294901760
  %v182 = vsub.f32 %v20, %v181
  %v183 = vand.u32 %v182, 4294901760
  %v184 = vsub.f32 %v182, %v183
  %v185 = vand.u32 %v184, 4294901760
  %186 = vmatpush1.msra.mxu0 %v185
  %187 = vmatprep.subr.mxu0 0.0
  %v188 = vand.u32 %v21, 4294901760
  %v189 = vsub.f32 %v21, %v188
  %v190 = vand.u32 %v189, 4294901760
  %v191 = vsub.f32 %v189, %v190
  %v192 = vand.u32 %v191, 4294901760
  %193 = vmatpush1.msra.mxu0 %v192
  %194 = vmatprep.subr.mxu0 0.0
  %v195 = vand.u32 %v22, 4294901760
  %v196 = vsub.f32 %v22, %v195
  %v197 = vand.u32 %v196, 4294901760
  %v198 = vsub.f32 %v196, %v197
  %v199 = vand.u32 %v198, 4294901760
  %200 = vmatpush1.msra.mxu0 %v199
  %201 = vmatprep.subr.mxu0 0.0
  %v202 = vand.u32 %v23, 4294901760
  %v203 = vsub.f32 %v23, %v202
  %v204 = vand.u32 %v203, 4294901760
  %v205 = vsub.f32 %v203, %v204
  %v206 = vand.u32 %v205, 4294901760
  %207 = vmatpush1.msra.mxu0 %v206
  %208 = vmatprep.subr.mxu0 0.0
  %v209 = vand.u32 %v24, 4294901760
  %v210 = vsub.f32 %v24, %v209
  %v211 = vand.u32 %v210, 4294901760
  %v212 = vsub.f32 %v210, %v211
  %v213 = vand.u32 %v212, 4294901760
  %214 = vmatpush1.msra.mxu0 %v213
  %215 = vmatprep.subr.mxu0 0.0
  %v216 = vand.u32 %v25, 4294901760
  %v217 = vsub.f32 %v25, %v216
  %v218 = vand.u32 %v217, 4294901760
  %v219 = vsub.f32 %v217, %v218
  %v220 = vand.u32 %v219, 4294901760
  %221 = vmatpush1.msra.mxu0 %v220
  %222 = vmatprep.subr.mxu0 0.0
  %v223 = vand.u32 %v26, 4294901760
  %v224 = vsub.f32 %v26, %v223
  %v225 = vand.u32 %v224, 4294901760
  %v226 = vsub.f32 %v224, %v225
  %v227 = vand.u32 %v226, 4294901760
  %228 = vmatpush1.msra.mxu0 %v227
  %229 = vmatprep.subr.mxu0 0.0
  %v230 = vand.u32 %v27, 4294901760
  %v231 = vsub.f32 %v27, %v230
  %v232 = vand.u32 %v231, 4294901760
  %v233 = vsub.f32 %v231, %v232
  %v234 = vand.u32 %v233, 4294901760
  %235 = vmatpush1.msra.mxu0 %v234
  %236 = vmatprep.subr.mxu0 0.0
  %237 = vmatpush1.msra.mxu0 0.0
  %238 = vmatprep.subr.mxu0 0.0
  %239 = vmatpush1.msra.mxu0 0.0
  %240 = vmatprep.subr.mxu0 0.0
  %241 = vmatpush1.msra.mxu0 0.0
  %242 = vmatprep.subr.mxu0 0.0
  %243 = vmatpush1.msra.mxu0 0.0
  %244 = vmatprep.subr.mxu0 0.0
  %245 = vmatpush1.msra.mxu0 0.0
  %246 = vmatprep.subr.mxu0 0.0
  %247 = vmatpush1.msra.mxu0 0.0
  %248 = vmatprep.subr.mxu0 0.0
  %249 = vmatpush1.msra.mxu0 0.0
  %250 = vmatprep.subr.mxu0 0.0
  %251 = vmatpush1.msra.mxu0 0.0
  %252 = vmatprep.subr.mxu0 0.0
  %253 = vmatpush1.msra.mxu0 0.0
  %254 = vmatprep.subr.mxu0 0.0
  %255 = vmatpush1.msra.mxu0 0.0
  %256 = vmatprep.subr.mxu0 0.0
  %257 = vmatpush1.msra.mxu0 0.0
  %258 = vmatprep.subr.mxu0 0.0
  %259 = vmatpush1.msra.mxu0 0.0
  %260 = vmatprep.subr.mxu0 0.0
  %261 = vmatpush1.msra.mxu0 0.0
  %262 = vmatprep.subr.mxu0 0.0
  %263 = vmatpush1.msra.mxu0 0.0
  %264 = vmatprep.subr.mxu0 0.0
  %265 = vmatpush1.msra.mxu0 0.0
  %266 = vmatprep.subr.mxu0 0.0
  %267 = vmatpush1.msra.mxu0 0.0
  %268 = vmatprep.mubr.f32.mxu0 0.0
  %v269 = vand.u32 %v11, 4294901760
  %270 = vmatmul.mubr.f32.gmra.mrb[0].mxu0 %v269
  %v271 = vpop.f32.mrb[0].mxu0
  %v272 = vadd.f32 %v121, %v271
  %v273 = vpop.f32.mrb[0].mxu0
  %274 = vdwg.mxu0
  %275 = vmatprep.subr.mxu0 0.0
  %v276 = vand.u32 %v12, 4294901760
  %v277 = vsub.f32 %v12, %v276
  %278 = vmatpush1.msra.mxu0 %v277
  %279 = vmatprep.subr.mxu0 0.0
  %v280 = vand.u32 %v13, 4294901760
  %v281 = vsub.f32 %v13, %v280
  %282 = vmatpush1.msra.mxu0 %v281
  %283 = vmatprep.subr.mxu0 0.0
  %v284 = vand.u32 %v14, 4294901760
  %v285 = vsub.f32 %v14, %v284
  %286 = vmatpush1.msra.mxu0 %v285
  %287 = vmatprep.subr.mxu0 0.0
  %v288 = vand.u32 %v15, 4294901760
  %v289 = vsub.f32 %v15, %v288
  %290 = vmatpush1.msra.mxu0 %v289
  %291 = vmatprep.subr.mxu0 0.0
  %v292 = vand.u32 %v16, 4294901760
  %v293 = vsub.f32 %v16, %v292
  %294 = vmatpush1.msra.mxu0 %v293
  %295 = vmatprep.subr.mxu0 0.0
  %v296 = vand.u32 %v17, 4294901760
  %v297 = vsub.f32 %v17, %v296
  %298 = vmatpush1.msra.mxu0 %v297
  %299 = vmatprep.subr.mxu0 0.0
  %v300 = vand.u32 %v18, 4294901760
  %v301 = vsub.f32 %v18, %v300
  %302 = vmatpush1.msra.mxu0 %v301
  %303 = vmatprep.subr.mxu0 0.0
  %v304 = vand.u32 %v19, 4294901760
  %v305 = vsub.f32 %v19, %v304
  %306 = vmatpush1.msra.mxu0 %v305
  %307 = vmatprep.subr.mxu0 0.0
  %v308 = vand.u32 %v20, 4294901760
  %v309 = vsub.f32 %v20, %v308
  %310 = vmatpush1.msra.mxu0 %v309
  %311 = vmatprep.subr.mxu0 0.0
  %v312 = vand.u32 %v21, 4294901760
  %v313 = vsub.f32 %v21, %v312
  %314 = vmatpush1.msra.mxu0 %v313
  %315 = vmatprep.subr.mxu0 0.0
  %v316 = vand.u32 %v22, 4294901760
  %v317 = vsub.f32 %v22, %v316
  %318 = vmatpush1.msra.mxu0 %v317
  %319 = vmatprep.subr.mxu0 0.0
  %v320 = vand.u32 %v23, 4294901760
  %v321 = vsub.f32 %v23, %v320
  %322 = vmatpush1.msra.mxu0 %v321
  %323 = vmatprep.subr.mxu0 0.0
  %v324 = vand.u32 %v24, 4294901760
  %v325 = vsub.f32 %v24, %v324
  %326 = vmatpush1.msra.mxu0 %v325
  %327 = vmatprep.subr.mxu0 0.0
  %v328 = vand.u32 %v25, 4294901760
  %v329 = vsub.f32 %v25, %v328
  %330 = vmatpush1.msra.mxu0 %v329
  %331 = vmatprep.subr.mxu0 0.0
  %v332 = vand.u32 %v26, 4294901760
  %v333 = vsub.f32 %v26, %v332
  %334 = vmatpush1.msra.mxu0 %v333
  %335 = vmatprep.subr.mxu0 0.0
  %v336 = vand.u32 %v27, 4294901760
  %v337 = vsub.f32 %v27, %v336
  %338 = vmatpush1.msra.mxu0 %v337
  %339 = vmatprep.subr.mxu0 0.0
  %340 = vmatpush1.msra.mxu0 0.0
  %341 = vmatprep.subr.mxu0 0.0
  %342 = vmatpush1.msra.mxu0 0.0
  %343 = vmatprep.subr.mxu0 0.0
  %344 = vmatpush1.msra.mxu0 0.0
  %345 = vmatprep.subr.mxu0 0.0
  %346 = vmatpush1.msra.mxu0 0.0
  %347 = vmatprep.subr.mxu0 0.0
  %348 = vmatpush1.msra.mxu0 0.0
  %349 = vmatprep.subr.mxu0 0.0
  %350 = vmatpush1.msra.mxu0 0.0
  %351 = vmatprep.subr.mxu0 0.0
  %352 = vmatpush1.msra.mxu0 0.0
  %353 = vmatprep.subr.mxu0 0.0
  %354 = vmatpush1.msra.mxu0 0.0
  %355 = vmatprep.subr.mxu0 0.0
  %356 = vmatpush1.msra.mxu0 0.0
  %357 = vmatprep.subr.mxu0 0.0
  %358 = vmatpush1.msra.mxu0 0.0
  %359 = vmatprep.subr.mxu0 0.0
  %360 = vmatpush1.msra.mxu0 0.0
  %361 = vmatprep.subr.mxu0 0.0
  %362 = vmatpush1.msra.mxu0 0.0
  %363 = vmatprep.subr.mxu0 0.0
  %364 = vmatpush1.msra.mxu0 0.0
  %365 = vmatprep.subr.mxu0 0.0
  %366 = vmatpush1.msra.mxu0 0.0
  %367 = vmatprep.subr.mxu0 0.0
  %368 = vmatpush1.msra.mxu0 0.0
  %369 = vmatprep.subr.mxu0 0.0
  %370 = vmatpush1.msra.mxu0 0.0
  %371 = vmatprep.mubr.f32.mxu0 0.0
  %v372 = vand.u32 %v11, 4294901760
  %v373 = vsub.f32 %v11, %v372
  %374 = vmatmul.mubr.f32.gmra.mrb[0].mxu0 %v373
  %v375 = vpop.f32.mrb[0].mxu0
  %v376 = vadd.f32 %v272, %v375
  %v377 = vpop.f32.mrb[0].mxu0
  %378 = vdwg.mxu0
  %379 = vmatprep.subr.mxu0 0.0
  %v380 = vand.u32 %v12, 4294901760
  %381 = vmatpush1.msra.mxu0 %v380
  %382 = vmatprep.subr.mxu0 0.0
  %v383 = vand.u32 %v13, 4294901760
  %384 = vmatpush1.msra.mxu0 %v383
  %385 = vmatprep.subr.mxu0 0.0
  %v386 = vand.u32 %v14, 4294901760
  %387 = vmatpush1.msra.mxu0 %v386
  %388 = vmatprep.subr.mxu0 0.0
  %v389 = vand.u32 %v15, 4294901760
  %390 = vmatpush1.msra.mxu0 %v389
  %391 = vmatprep.subr.mxu0 0.0
  %v392 = vand.u32 %v16, 4294901760
  %393 = vmatpush1.msra.mxu0 %v392
  %394 = vmatprep.subr.mxu0 0.0
  %v395 = vand.u32 %v17, 4294901760
  %396 = vmatpush1.msra.mxu0 %v395
  %397 = vmatprep.subr.mxu0 0.0
  %v398 = vand.u32 %v18, 4294901760
  %399 = vmatpush1.msra.mxu0 %v398
  %400 = vmatprep.subr.mxu0 0.0
  %v401 = vand.u32 %v19, 4294901760
  %402 = vmatpush1.msra.mxu0 %v401
  %403 = vmatprep.subr.mxu0 0.0
  %v404 = vand.u32 %v20, 4294901760
  %405 = vmatpush1.msra.mxu0 %v404
  %406 = vmatprep.subr.mxu0 0.0
  %v407 = vand.u32 %v21, 4294901760
  %408 = vmatpush1.msra.mxu0 %v407
  %409 = vmatprep.subr.mxu0 0.0
  %v410 = vand.u32 %v22, 4294901760
  %411 = vmatpush1.msra.mxu0 %v410
  %412 = vmatprep.subr.mxu0 0.0
  %v413 = vand.u32 %v23, 4294901760
  %414 = vmatpush1.msra.mxu0 %v413
  %415 = vmatprep.subr.mxu0 0.0
  %v416 = vand.u32 %v24, 4294901760
  %417 = vmatpush1.msra.mxu0 %v416
  %418 = vmatprep.subr.mxu0 0.0
  %v419 = vand.u32 %v25, 4294901760
  %420 = vmatpush1.msra.mxu0 %v419
  %421 = vmatprep.subr.mxu0 0.0
  %v422 = vand.u32 %v26, 4294901760
  %423 = vmatpush1.msra.mxu0 %v422
  %424 = vmatprep.subr.mxu0 0.0
  %v425 = vand.u32 %v27, 4294901760
  %426 = vmatpush1.msra.mxu0 %v425
  %427 = vmatprep.subr.mxu0 0.0
  %428 = vmatpush1.msra.mxu0 0.0
  %429 = vmatprep.subr.mxu0 0.0
  %430 = vmatpush1.msra.mxu0 0.0
  %431 = vmatprep.subr.mxu0 0.0
  %432 = vmatpush1.msra.mxu0 0.0
  %433 = vmatprep.subr.mxu0 0.0
  %434 = vmatpush1.msra.mxu0 0.0
  %435 = vmatprep.subr.mxu0 0.0
  %436 = vmatpush1.msra.mxu0 0.0
  %437 = vmatprep.subr.mxu0 0.0
  %438 = vmatpush1.msra.mxu0 0.0
  %439 = vmatprep.subr.mxu0 0.0
  %440 = vmatpush1.msra.mxu0 0.0
  %441 = vmatprep.subr.mxu0 0.0
  %442 = vmatpush1.msra.mxu0 0.0
  %443 = vmatprep.subr.mxu0 0.0
  %444 = vmatpush1.msra.mxu0 0.0
  %445 = vmatprep.subr.mxu0 0.0
  %446 = vmatpush1.msra.mxu0 0.0
  %447 = vmatprep.subr.mxu0 0.0
  %448 = vmatpush1.msra.mxu0 0.0
  %449 = vmatprep.subr.mxu0 0.0
  %450 = vmatpush1.msra.mxu0 0.0
  %451 = vmatprep.subr.mxu0 0.0
  %452 = vmatpush1.msra.mxu0 0.0
  %453 = vmatprep.subr.mxu0 0.0
  %454 = vmatpush1.msra.mxu0 0.0
  %455 = vmatprep.subr.mxu0 0.0
  %456 = vmatpush1.msra.mxu0 0.0
  %457 = vmatprep.subr.mxu0 0.0
  %458 = vmatpush1.msra.mxu0 0.0
  %459 = vmatprep.mubr.f32.mxu0 0.0
  %v460 = vand.u32 %v11, 4294901760
  %v461 = vsub.f32 %v11, %v460
  %v462 = vand.u32 %v461, 4294901760
  %463 = vmatmul.mubr.f32.gmra.mrb[0].mxu0 %v462
  %v464 = vpop.f32.mrb[0].mxu0
  %v465 = vadd.f32 %v376, %v464
  %v466 = vpop.f32.mrb[0].mxu0
  %467 = vdwg.mxu0
  %468 = vmatprep.subr.mxu0 0.0
  %v469 = vand.u32 %v12, 4294901760
  %v470 = vsub.f32 %v12, %v469
  %v471 = vand.u32 %v470, 4294901760
  %472 = vmatpush1.msra.mxu0 %v471
  %473 = vmatprep.subr.mxu0 0.0
  %v474 = vand.u32 %v13, 4294901760
  %v475 = vsub.f32 %v13, %v474
  %v476 = vand.u32 %v475, 4294901760
  %477 = vmatpush1.msra.mxu0 %v476
  %478 = vmatprep.subr.mxu0 0.0
  %v479 = vand.u32 %v14, 4294901760
  %v480 = vsub.f32 %v14, %v479
  %v481 = vand.u32 %v480, 4294901760
  %482 = vmatpush1.msra.mxu0 %v481
  %483 = vmatprep.subr.mxu0 0.0
  %v484 = vand.u32 %v15, 4294901760
  %v485 = vsub.f32 %v15, %v484
  %v486 = vand.u32 %v485, 4294901760
  %487 = vmatpush1.msra.mxu0 %v486
  %488 = vmatprep.subr.mxu0 0.0
  %v489 = vand.u32 %v16, 4294901760
  %v490 = vsub.f32 %v16, %v489
  %v491 = vand.u32 %v490, 4294901760
  %492 = vmatpush1.msra.mxu0 %v491
  %493 = vmatprep.subr.mxu0 0.0
  %v494 = vand.u32 %v17, 4294901760
  %v495 = vsub.f32 %v17, %v494
  %v496 = vand.u32 %v495, 4294901760
  %497 = vmatpush1.msra.mxu0 %v496
  %498 = vmatprep.subr.mxu0 0.0
  %v499 = vand.u32 %v18, 4294901760
  %v500 = vsub.f32 %v18, %v499
  %v501 = vand.u32 %v500, 4294901760
  %502 = vmatpush1.msra.mxu0 %v501
  %503 = vmatprep.subr.mxu0 0.0
  %v504 = vand.u32 %v19, 4294901760
  %v505 = vsub.f32 %v19, %v504
  %v506 = vand.u32 %v505, 4294901760
  %507 = vmatpush1.msra.mxu0 %v506
  %508 = vmatprep.subr.mxu0 0.0
  %v509 = vand.u32 %v20, 4294901760
  %v510 = vsub.f32 %v20, %v509
  %v511 = vand.u32 %v510, 4294901760
  %512 = vmatpush1.msra.mxu0 %v511
  %513 = vmatprep.subr.mxu0 0.0
  %v514 = vand.u32 %v21, 4294901760
  %v515 = vsub.f32 %v21, %v514
  %v516 = vand.u32 %v515, 4294901760
  %517 = vmatpush1.msra.mxu0 %v516
  %518 = vmatprep.subr.mxu0 0.0
  %v519 = vand.u32 %v22, 4294901760
  %v520 = vsub.f32 %v22, %v519
  %v521 = vand.u32 %v520, 4294901760
  %522 = vmatpush1.msra.mxu0 %v521
  %523 = vmatprep.subr.mxu0 0.0
  %v524 = vand.u32 %v23, 4294901760
  %v525 = vsub.f32 %v23, %v524
  %v526 = vand.u32 %v525, 4294901760
  %527 = vmatpush1.msra.mxu0 %v526
  %528 = vmatprep.subr.mxu0 0.0
  %v529 = vand.u32 %v24, 4294901760
  %v530 = vsub.f32 %v24, %v529
  %v531 = vand.u32 %v530, 4294901760
  %532 = vmatpush1.msra.mxu0 %v531
  %533 = vmatprep.subr.mxu0 0.0
  %v534 = vand.u32 %v25, 4294901760
  %v535 = vsub.f32 %v25, %v534
  %v536 = vand.u32 %v535, 4294901760
  %537 = vmatpush1.msra.mxu0 %v536
  %538 = vmatprep.subr.mxu0 0.0
  %v539 = vand.u32 %v26, 4294901760
  %v540 = vsub.f32 %v26, %v539
  %v541 = vand.u32 %v540, 4294901760
  %542 = vmatpush1.msra.mxu0 %v541
  %543 = vmatprep.subr.mxu0 0.0
  %v544 = vand.u32 %v27, 4294901760
  %v545 = vsub.f32 %v27, %v544
  %v546 = vand.u32 %v545, 4294901760
  %547 = vmatpush1.msra.mxu0 %v546
  %548 = vmatprep.subr.mxu0 0.0
  %549 = vmatpush1.msra.mxu0 0.0
  %550 = vmatprep.subr.mxu0 0.0
  %551 = vmatpush1.msra.mxu0 0.0
  %552 = vmatprep.subr.mxu0 0.0
  %553 = vmatpush1.msra.mxu0 0.0
  %554 = vmatprep.subr.mxu0 0.0
  %555 = vmatpush1.msra.mxu0 0.0
  %556 = vmatprep.subr.mxu0 0.0
  %557 = vmatpush1.msra.mxu0 0.0
  %558 = vmatprep.subr.mxu0 0.0
  %559 = vmatpush1.msra.mxu0 0.0
  %560 = vmatprep.subr.mxu0 0.0
  %561 = vmatpush1.msra.mxu0 0.0
  %562 = vmatprep.subr.mxu0 0.0
  %563 = vmatpush1.msra.mxu0 0.0
  %564 = vmatprep.subr.mxu0 0.0
  %565 = vmatpush1.msra.mxu0 0.0
  %566 = vmatprep.subr.mxu0 0.0
  %567 = vmatpush1.msra.mxu0 0.0
  %568 = vmatprep.subr.mxu0 0.0
  %569 = vmatpush1.msra.mxu0 0.0
  %570 = vmatprep.subr.mxu0 0.0
  %571 = vmatpush1.msra.mxu0 0.0
  %572 = vmatprep.subr.mxu0 0.0
  %573 = vmatpush1.msra.mxu0 0.0
  %574 = vmatprep.subr.mxu0 0.0
  %575 = vmatpush1.msra.mxu0 0.0
  %576 = vmatprep.subr.mxu0 0.0
  %577 = vmatpush1.msra.mxu0 0.0
  %578 = vmatprep.subr.mxu0 0.0
  %579 = vmatpush1.msra.mxu0 0.0
  %580 = vmatprep.mubr.f32.mxu0 0.0
  %v581 = vand.u32 %v11, 4294901760
  %582 = vmatmul.mubr.f32.gmra.mrb[0].mxu0 %v581
  %v583 = vpop.f32.mrb[0].mxu0
  %v584 = vadd.f32 %v465, %v583
  %v585 = vpop.f32.mrb[0].mxu0
  %586 = vdwg.mxu0
  %587 = vmatprep.subr.mxu0 0.0
  %v588 = vand.u32 %v12, 4294901760
  %589 = vmatpush1.msra.mxu0 %v588
  %590 = vmatprep.subr.mxu0 0.0
  %v591 = vand.u32 %v13, 4294901760
  %592 = vmatpush1.msra.mxu0 %v591
  %593 = vmatprep.subr.mxu0 0.0
  %v594 = vand.u32 %v14, 4294901760
  %595 = vmatpush1.msra.mxu0 %v594
  %596 = vmatprep.subr.mxu0 0.0
  %v597 = vand.u32 %v15, 4294901760
  %598 = vmatpush1.msra.mxu0 %v597
  %599 = vmatprep.subr.mxu0 0.0
  %v600 = vand.u32 %v16, 4294901760
  %601 = vmatpush1.msra.mxu0 %v600
  %602 = vmatprep.subr.mxu0 0.0
  %v603 = vand.u32 %v17, 4294901760
  %604 = vmatpush1.msra.mxu0 %v603
  %605 = vmatprep.subr.mxu0 0.0
  %v606 = vand.u32 %v18, 4294901760
  %607 = vmatpush1.msra.mxu0 %v606
  %608 = vmatprep.subr.mxu0 0.0
  %v609 = vand.u32 %v19, 4294901760
  %610 = vmatpush1.msra.mxu0 %v609
  %611 = vmatprep.subr.mxu0 0.0
  %v612 = vand.u32 %v20, 4294901760
  %613 = vmatpush1.msra.mxu0 %v612
  %614 = vmatprep.subr.mxu0 0.0
  %v615 = vand.u32 %v21, 4294901760
  %616 = vmatpush1.msra.mxu0 %v615
  %617 = vmatprep.subr.mxu0 0.0
  %v618 = vand.u32 %v22, 4294901760
  %619 = vmatpush1.msra.mxu0 %v618
  %620 = vmatprep.subr.mxu0 0.0
  %v621 = vand.u32 %v23, 4294901760
  %622 = vmatpush1.msra.mxu0 %v621
  %623 = vmatprep.subr.mxu0 0.0
  %v624 = vand.u32 %v24, 4294901760
  %625 = vmatpush1.msra.mxu0 %v624
  %626 = vmatprep.subr.mxu0 0.0
  %v627 = vand.u32 %v25, 4294901760
  %628 = vmatpush1.msra.mxu0 %v627
  %629 = vmatprep.subr.mxu0 0.0
  %v630 = vand.u32 %v26, 4294901760
  %631 = vmatpush1.msra.mxu0 %v630
  %632 = vmatprep.subr.mxu0 0.0
  %v633 = vand.u32 %v27, 4294901760
  %634 = vmatpush1.msra.mxu0 %v633
  %635 = vmatprep.subr.mxu0 0.0
  %636 = vmatpush1.msra.mxu0 0.0
  %637 = vmatprep.subr.mxu0 0.0
  %638 = vmatpush1.msra.mxu0 0.0
  %639 = vmatprep.subr.mxu0 0.0
  %640 = vmatpush1.msra.mxu0 0.0
  %641 = vmatprep.subr.mxu0 0.0
  %642 = vmatpush1.msra.mxu0 0.0
  %643 = vmatprep.subr.mxu0 0.0
  %644 = vmatpush1.msra.mxu0 0.0
  %645 = vmatprep.subr.mxu0 0.0
  %646 = vmatpush1.msra.mxu0 0.0
  %647 = vmatprep.subr.mxu0 0.0
  %648 = vmatpush1.msra.mxu0 0.0
  %649 = vmatprep.subr.mxu0 0.0
  %650 = vmatpush1.msra.mxu0 0.0
  %651 = vmatprep.subr.mxu0 0.0
  %652 = vmatpush1.msra.mxu0 0.0
  %653 = vmatprep.subr.mxu0 0.0
  %654 = vmatpush1.msra.mxu0 0.0
  %655 = vmatprep.subr.mxu0 0.0
  %656 = vmatpush1.msra.mxu0 0.0
  %657 = vmatprep.subr.mxu0 0.0
  %658 = vmatpush1.msra.mxu0 0.0
  %659 = vmatprep.subr.mxu0 0.0
  %660 = vmatpush1.msra.mxu0 0.0
  %661 = vmatprep.subr.mxu0 0.0
  %662 = vmatpush1.msra.mxu0 0.0
  %663 = vmatprep.subr.mxu0 0.0
  %664 = vmatpush1.msra.mxu0 0.0
  %665 = vmatprep.subr.mxu0 0.0
  %666 = vmatpush1.msra.mxu0 0.0
  %667 = vmatprep.mubr.f32.mxu0 0.0
  %v668 = vand.u32 %v11, 4294901760
  %669 = vmatmul.mubr.f32.gmra.mrb[0].mxu0 %v668
  %v670 = vpop.f32.mrb[0].mxu0
  %v671 = vadd.f32 %v584, %v670
  %v672 = vpop.f32.mrb[0].mxu0
  %673 = vdwg.mxu0
  %vm674 = vcmp.ge.f32.partialorder %v671, 0.0
  %v675 = vmul.f32 %v671, 0.01
  %v676 = vsel %vm674, %v671, %v675
  %s677 = scalar_lea.vmem %s1, 136
  %v678 = vld [vmem:[%s677] sm:$0xff]
  %v679 = vld [vmem:[%s677 + $0x8] sm:$0xff]
  %v680 = vld [vmem:[%s677 + $0x10] sm:$0xff]
  %v681 = vld [vmem:[%s677 + $0x18] sm:$0xff]
  %v682 = vld [vmem:[%s677 + $0x20] sm:$0xff]
  %v683 = vld [vmem:[%s677 + $0x28] sm:$0xff]
  %v684 = vld [vmem:[%s677 + $0x30] sm:$0xff]
  %v685 = vld [vmem:[%s677 + $0x38] sm:$0xff]
  %v686 = vld [vmem:[%s677 + $0x40] sm:$0xff]
  %v687 = vld [vmem:[%s677 + $0x48] sm:$0xff]
  %v688 = vld [vmem:[%s677 + $0x50] sm:$0xff]
  %v689 = vld [vmem:[%s677 + $0x58] sm:$0xff]
  %v690 = vld [vmem:[%s677 + $0x60] sm:$0xff]
  %v691 = vld [vmem:[%s677 + $0x68] sm:$0xff]
  %v692 = vld [vmem:[%s677 + $0x70] sm:$0xff]
  %v693 = vld [vmem:[%s677 + $0x78] sm:$0xff]
  %v694 = vld [vmem:[%s677 + $0x80] sm:$0x1]
  %v695 = vlaneseq
  %v696 = vshrl.u32 %v695, 7
  %v697 = vsub.s32 0, %v696
  %v698 = vrot.slane %v694, %v697
  %699 = vmatprep.subr.mxu0 0.0
  %v700 = vand.u32 %v678, 4294901760
  %701 = vmatpush1.msra.mxu0 %v700
  %702 = vmatprep.subr.mxu0 0.0
  %v703 = vand.u32 %v679, 4294901760
  %704 = vmatpush1.msra.mxu0 %v703
  %705 = vmatprep.subr.mxu0 0.0
  %v706 = vand.u32 %v680, 4294901760
  %707 = vmatpush1.msra.mxu0 %v706
  %708 = vmatprep.subr.mxu0 0.0
  %v709 = vand.u32 %v681, 4294901760
  %710 = vmatpush1.msra.mxu0 %v709
  %711 = vmatprep.subr.mxu0 0.0
  %v712 = vand.u32 %v682, 4294901760
  %713 = vmatpush1.msra.mxu0 %v712
  %714 = vmatprep.subr.mxu0 0.0
  %v715 = vand.u32 %v683, 4294901760
  %716 = vmatpush1.msra.mxu0 %v715
  %717 = vmatprep.subr.mxu0 0.0
  %v718 = vand.u32 %v684, 4294901760
  %719 = vmatpush1.msra.mxu0 %v718
  %720 = vmatprep.subr.mxu0 0.0
  %v721 = vand.u32 %v685, 4294901760
  %722 = vmatpush1.msra.mxu0 %v721
  %723 = vmatprep.subr.mxu0 0.0
  %v724 = vand.u32 %v686, 4294901760
  %725 = vmatpush1.msra.mxu0 %v724
  %726 = vmatprep.subr.mxu0 0.0
  %v727 = vand.u32 %v687, 4294901760
  %728 = vmatpush1.msra.mxu0 %v727
  %729 = vmatprep.subr.mxu0 0.0
  %v730 = vand.u32 %v688, 4294901760
  %731 = vmatpush1.msra.mxu0 %v730
  %732 = vmatprep.subr.mxu0 0.0
  %v733 = vand.u32 %v689, 4294901760
  %734 = vmatpush1.msra.mxu0 %v733
  %735 = vmatprep.subr.mxu0 0.0
  %v736 = vand.u32 %v690, 4294901760
  %737 = vmatpush1.msra.mxu0 %v736
  %738 = vmatprep.subr.mxu0 0.0
  %v739 = vand.u32 %v691, 4294901760
  %740 = vmatpush1.msra.mxu0 %v739
  %741 = vmatprep.subr.mxu0 0.0
  %v742 = vand.u32 %v692, 4294901760
  %743 = vmatpush1.msra.mxu0 %v742
  %744 = vmatprep.subr.mxu0 0.0
  %v745 = vand.u32 %v693, 4294901760
  %746 = vmatpush1.msra.mxu0 %v745
  %747 = vmatprep.subr.mxu0 0.0
  %748 = vmatpush1.msra.mxu0 0.0
  %749 = vmatprep.subr.mxu0 0.0
  %750 = vmatpush1.msra.mxu0 0.0
  %751 = vmatprep.subr.mxu0 0.0
  %752 = vmatpush1.msra.mxu0 0.0
  %753 = vmatprep.subr.mxu0 0.0
  %754 = vmatpush1.msra.mxu0 0.0
  %755 = vmatprep.subr.mxu0 0.0
  %756 = vmatpush1.msra.mxu0 0.0
  %757 = vmatprep.subr.mxu0 0.0
  %758 = vmatpush1.msra.mxu0 0.0
  %759 = vmatprep.subr.mxu0 0.0
  %760 = vmatpush1.msra.mxu0 0.0
  %761 = vmatprep.subr.mxu0 0.0
  %762 = vmatpush1.msra.mxu0 0.0
  %763 = vmatprep.subr.mxu0 0.0
  %764 = vmatpush1.msra.mxu0 0.0
  %765 = vmatprep.subr.mxu0 0.0
  %766 = vmatpush1.msra.mxu0 0.0
  %767 = vmatprep.subr.mxu0 0.0
  %768 = vmatpush1.msra.mxu0 0.0
  %769 = vmatprep.subr.mxu0 0.0
  %770 = vmatpush1.msra.mxu0 0.0
  %771 = vmatprep.subr.mxu0 0.0
  %772 = vmatpush1.msra.mxu0 0.0
  %773 = vmatprep.subr.mxu0 0.0
  %774 = vmatpush1.msra.mxu0 0.0
  %775 = vmatprep.subr.mxu0 0.0
  %776 = vmatpush1.msra.mxu0 0.0
  %777 = vmatprep.subr.mxu0 0.0
  %778 = vmatpush1.msra.mxu0 0.0
  %779 = vmatprep.mubr.f32.mxu0 0.0
  %v780 = vand.u32 %v676, 4294901760
  %v781 = vsub.f32 %v676, %v780
  %v782 = vand.u32 %v781, 4294901760
  %v783 = vsub.f32 %v781, %v782
  %v784 = vand.u32 %v783, 4294901760
  %785 = vmatmul.mubr.f32.gmra.mrb[0].mxu0 %v784
  %v786 = vpop.f32.mrb[0].mxu0
  %v787 = vadd.f32 %v698, %v786
  %v788 = vpop.f32.mrb[0].mxu0
  %789 = vdwg.mxu0
  %790 = vmatprep.subr.mxu0 0.0
  %v791 = vand.u32 %v678, 4294901760
  %v792 = vsub.f32 %v678, %v791
  %v793 = vand.u32 %v792, 4294901760
  %v794 = vsub.f32 %v792, %v793
  %v795 = vand.u32 %v794, 4294901760
  %796 = vmatpush1.msra.mxu0 %v795
  %797 = vmatprep.subr.mxu0 0.0
  %v798 = vand.u32 %v679, 4294901760
  %v799 = vsub.f32 %v679, %v798
  %v800 = vand.u32 %v799, 4294901760
  %v801 = vsub.f32 %v799, %v800
  %v802 = vand.u32 %v801, 4294901760
  %803 = vmatpush1.msra.mxu0 %v802
  %804 = vmatprep.subr.mxu0 0.0
  %v805 = vand.u32 %v680, 4294901760
  %v806 = vsub.f32 %v680, %v805
  %v807 = vand.u32 %v806, 4294901760
  %v808 = vsub.f32 %v806, %v807
  %v809 = vand.u32 %v808, 4294901760
  %810 = vmatpush1.msra.mxu0 %v809
  %811 = vmatprep.subr.mxu0 0.0
  %v812 = vand.u32 %v681, 4294901760
  %v813 = vsub.f32 %v681, %v812
  %v814 = vand.u32 %v813, 4294901760
  %v815 = vsub.f32 %v813, %v814
  %v816 = vand.u32 %v815, 4294901760
  %817 = vmatpush1.msra.mxu0 %v816
  %818 = vmatprep.subr.mxu0 0.0
  %v819 = vand.u32 %v682, 4294901760
  %v820 = vsub.f32 %v682, %v819
  %v821 = vand.u32 %v820, 4294901760
  %v822 = vsub.f32 %v820, %v821
  %v823 = vand.u32 %v822, 4294901760
  %824 = vmatpush1.msra.mxu0 %v823
  %825 = vmatprep.subr.mxu0 0.0
  %v826 = vand.u32 %v683, 4294901760
  %v827 = vsub.f32 %v683, %v826
  %v828 = vand.u32 %v827, 4294901760
  %v829 = vsub.f32 %v827, %v828
  %v830 = vand.u32 %v829, 4294901760
  %831 = vmatpush1.msra.mxu0 %v830
  %832 = vmatprep.subr.mxu0 0.0
  %v833 = vand.u32 %v684, 4294901760
  %v834 = vsub.f32 %v684, %v833
  %v835 = vand.u32 %v834, 4294901760
  %v836 = vsub.f32 %v834, %v835
  %v837 = vand.u32 %v836, 4294901760
  %838 = vmatpush1.msra.mxu0 %v837
  %839 = vmatprep.subr.mxu0 0.0
  %v840 = vand.u32 %v685, 4294901760
  %v841 = vsub.f32 %v685, %v840
  %v842 = vand.u32 %v841, 4294901760
  %v843 = vsub.f32 %v841, %v842
  %v844 = vand.u32 %v843, 4294901760
  %845 = vmatpush1.msra.mxu0 %v844
  %846 = vmatprep.subr.mxu0 0.0
  %v847 = vand.u32 %v686, 4294901760
  %v848 = vsub.f32 %v686, %v847
  %v849 = vand.u32 %v848, 4294901760
  %v850 = vsub.f32 %v848, %v849
  %v851 = vand.u32 %v850, 4294901760
  %852 = vmatpush1.msra.mxu0 %v851
  %853 = vmatprep.subr.mxu0 0.0
  %v854 = vand.u32 %v687, 4294901760
  %v855 = vsub.f32 %v687, %v854
  %v856 = vand.u32 %v855, 4294901760
  %v857 = vsub.f32 %v855, %v856
  %v858 = vand.u32 %v857, 4294901760
  %859 = vmatpush1.msra.mxu0 %v858
  %860 = vmatprep.subr.mxu0 0.0
  %v861 = vand.u32 %v688, 4294901760
  %v862 = vsub.f32 %v688, %v861
  %v863 = vand.u32 %v862, 4294901760
  %v864 = vsub.f32 %v862, %v863
  %v865 = vand.u32 %v864, 4294901760
  %866 = vmatpush1.msra.mxu0 %v865
  %867 = vmatprep.subr.mxu0 0.0
  %v868 = vand.u32 %v689, 4294901760
  %v869 = vsub.f32 %v689, %v868
  %v870 = vand.u32 %v869, 4294901760
  %v871 = vsub.f32 %v869, %v870
  %v872 = vand.u32 %v871, 4294901760
  %873 = vmatpush1.msra.mxu0 %v872
  %874 = vmatprep.subr.mxu0 0.0
  %v875 = vand.u32 %v690, 4294901760
  %v876 = vsub.f32 %v690, %v875
  %v877 = vand.u32 %v876, 4294901760
  %v878 = vsub.f32 %v876, %v877
  %v879 = vand.u32 %v878, 4294901760
  %880 = vmatpush1.msra.mxu0 %v879
  %881 = vmatprep.subr.mxu0 0.0
  %v882 = vand.u32 %v691, 4294901760
  %v883 = vsub.f32 %v691, %v882
  %v884 = vand.u32 %v883, 4294901760
  %v885 = vsub.f32 %v883, %v884
  %v886 = vand.u32 %v885, 4294901760
  %887 = vmatpush1.msra.mxu0 %v886
  %888 = vmatprep.subr.mxu0 0.0
  %v889 = vand.u32 %v692, 4294901760
  %v890 = vsub.f32 %v692, %v889
  %v891 = vand.u32 %v890, 4294901760
  %v892 = vsub.f32 %v890, %v891
  %v893 = vand.u32 %v892, 4294901760
  %894 = vmatpush1.msra.mxu0 %v893
  %895 = vmatprep.subr.mxu0 0.0
  %v896 = vand.u32 %v693, 4294901760
  %v897 = vsub.f32 %v693, %v896
  %v898 = vand.u32 %v897, 4294901760
  %v899 = vsub.f32 %v897, %v898
  %v900 = vand.u32 %v899, 4294901760
  %901 = vmatpush1.msra.mxu0 %v900
  %902 = vmatprep.subr.mxu0 0.0
  %903 = vmatpush1.msra.mxu0 0.0
  %904 = vmatprep.subr.mxu0 0.0
  %905 = vmatpush1.msra.mxu0 0.0
  %906 = vmatprep.subr.mxu0 0.0
  %907 = vmatpush1.msra.mxu0 0.0
  %908 = vmatprep.subr.mxu0 0.0
  %909 = vmatpush1.msra.mxu0 0.0
  %910 = vmatprep.subr.mxu0 0.0
  %911 = vmatpush1.msra.mxu0 0.0
  %912 = vmatprep.subr.mxu0 0.0
  %913 = vmatpush1.msra.mxu0 0.0
  %914 = vmatprep.subr.mxu0 0.0
  %915 = vmatpush1.msra.mxu0 0.0
  %916 = vmatprep.subr.mxu0 0.0
  %917 = vmatpush1.msra.mxu0 0.0
  %918 = vmatprep.subr.mxu0 0.0
  %919 = vmatpush1.msra.mxu0 0.0
  %920 = vmatprep.subr.mxu0 0.0
  %921 = vmatpush1.msra.mxu0 0.0
  %922 = vmatprep.subr.mxu0 0.0
  %923 = vmatpush1.msra.mxu0 0.0
  %924 = vmatprep.subr.mxu0 0.0
  %925 = vmatpush1.msra.mxu0 0.0
  %926 = vmatprep.subr.mxu0 0.0
  %927 = vmatpush1.msra.mxu0 0.0
  %928 = vmatprep.subr.mxu0 0.0
  %929 = vmatpush1.msra.mxu0 0.0
  %930 = vmatprep.subr.mxu0 0.0
  %931 = vmatpush1.msra.mxu0 0.0
  %932 = vmatprep.subr.mxu0 0.0
  %933 = vmatpush1.msra.mxu0 0.0
  %934 = vmatprep.mubr.f32.mxu0 0.0
  %v935 = vand.u32 %v676, 4294901760
  %936 = vmatmul.mubr.f32.gmra.mrb[0].mxu0 %v935
  %v937 = vpop.f32.mrb[0].mxu0
  %v938 = vadd.f32 %v787, %v937
  %v939 = vpop.f32.mrb[0].mxu0
  %940 = vdwg.mxu0
  %941 = vmatprep.subr.mxu0 0.0
  %v942 = vand.u32 %v678, 4294901760
  %v943 = vsub.f32 %v678, %v942
  %944 = vmatpush1.msra.mxu0 %v943
  %945 = vmatprep.subr.mxu0 0.0
  %v946 = vand.u32 %v679, 4294901760
  %v947 = vsub.f32 %v679, %v946
  %948 = vmatpush1.msra.mxu0 %v947
  %949 = vmatprep.subr.mxu0 0.0
  %v950 = vand.u32 %v680, 4294901760
  %v951 = vsub.f32 %v680, %v950
  %952 = vmatpush1.msra.mxu0 %v951
  %953 = vmatprep.subr.mxu0 0.0
  %v954 = vand.u32 %v681, 4294901760
  %v955 = vsub.f32 %v681, %v954
  %956 = vmatpush1.msra.mxu0 %v955
  %957 = vmatprep.subr.mxu0 0.0
  %v958 = vand.u32 %v682, 4294901760
  %v959 = vsub.f32 %v682, %v958
  %960 = vmatpush1.msra.mxu0 %v959
  %961 = vmatprep.subr.mxu0 0.0
  %v962 = vand.u32 %v683, 4294901760
  %v963 = vsub.f32 %v683, %v962
  %964 = vmatpush1.msra.mxu0 %v963
  %965 = vmatprep.subr.mxu0 0.0
  %v966 = vand.u32 %v684, 4294901760
  %v967 = vsub.f32 %v684, %v966
  %968 = vmatpush1.msra.mxu0 %v967
  %969 = vmatprep.subr.mxu0 0.0
  %v970 = vand.u32 %v685, 4294901760
  %v971 = vsub.f32 %v685, %v970
  %972 = vmatpush1.msra.mxu0 %v971
  %973 = vmatprep.subr.mxu0 0.0
  %v974 = vand.u32 %v686, 4294901760
  %v975 = vsub.f32 %v686, %v974
  %976 = vmatpush1.msra.mxu0 %v975
  %977 = vmatprep.subr.mxu0 0.0
  %v978 = vand.u32 %v687, 4294901760
  %v979 = vsub.f32 %v687, %v978
  %980 = vmatpush1.msra.mxu0 %v979
  %981 = vmatprep.subr.mxu0 0.0
  %v982 = vand.u32 %v688, 4294901760
  %v983 = vsub.f32 %v688, %v982
  %984 = vmatpush1.msra.mxu0 %v983
  %985 = vmatprep.subr.mxu0 0.0
  %v986 = vand.u32 %v689, 4294901760
  %v987 = vsub.f32 %v689, %v986
  %988 = vmatpush1.msra.mxu0 %v987
  %989 = vmatprep.subr.mxu0 0.0
  %v990 = vand.u32 %v690, 4294901760
  %v991 = vsub.f32 %v690, %v990
  %992 = vmatpush1.msra.mxu0 %v991
  %993 = vmatprep.subr.mxu0 0.0
  %v994 = vand.u32 %v691, 4294901760
  %v995 = vsub.f32 %v691, %v994
  %996 = vmatpush1.msra.mxu0 %v995
  %997 = vmatprep.subr.mxu0 0.0
  %v998 = vand.u32 %v692, 4294901760
  %v999 = vsub.f32 %v692, %v998
  %1000 = vmatpush1.msra.mxu0 %v999
  %1001 = vmatprep.subr.mxu0 0.0
  %v1002 = vand.u32 %v693, 4294901760
  %v1003 = vsub.f32 %v693, %v1002
  %1004 = vmatpush1.msra.mxu0 %v1003
  %1005 = vmatprep.subr.mxu0 0.0
  %1006 = vmatpush1.msra.mxu0 0.0
  %1007 = vmatprep.subr.mxu0 0.0
  %1008 = vmatpush1.msra.mxu0 0.0
  %1009 = vmatprep.subr.mxu0 0.0
  %1010 = vmatpush1.msra.mxu0 0.0
  %1011 = vmatprep.subr.mxu0 0.0
  %1012 = vmatpush1.msra.mxu0 0.0
  %1013 = vmatprep.subr.mxu0 0.0
  %1014 = vmatpush1.msra.mxu0 0.0
  %1015 = vmatprep.subr.mxu0 0.0
  %1016 = vmatpush1.msra.mxu0 0.0
  %1017 = vmatprep.subr.mxu0 0.0
  %1018 = vmatpush1.msra.mxu0 0.0
  %1019 = vmatprep.subr.mxu0 0.0
  %1020 = vmatpush1.msra.mxu0 0.0
  %1021 = vmatprep.subr.mxu0 0.0
  %1022 = vmatpush1.msra.mxu0 0.0
  %1023 = vmatprep.subr.mxu0 0.0
  %1024 = vmatpush1.msra.mxu0 0.0
  %1025 = vmatprep.subr.mxu0 0.0
  %1026 = vmatpush1.msra.mxu0 0.0
  %1027 = vmatprep.subr.mxu0 0.0
  %1028 = vmatpush1.msra.mxu0 0.0
  %1029 = vmatprep.subr.mxu0 0.0
  %1030 = vmatpush1.msra.mxu0 0.0
  %1031 = vmatprep.subr.mxu0 0.0
  %1032 = vmatpush1.msra.mxu0 0.0
  %1033 = vmatprep.subr.mxu0 0.0
  %1034 = vmatpush1.msra.mxu0 0.0
  %1035 = vmatprep.subr.mxu0 0.0
  %1036 = vmatpush1.msra.mxu0 0.0
  %1037 = vmatprep.mubr.f32.mxu0 0.0
  %v1038 = vand.u32 %v676, 4294901760
  %v1039 = vsub.f32 %v676, %v1038
  %1040 = vmatmul.mubr.f32.gmra.mrb[0].mxu0 %v1039
  %v1041 = vpop.f32.mrb[0].mxu0
  %v1042 = vadd.f32 %v938, %v1041
  %v1043 = vpop.f32.mrb[0].mxu0
  %1044 = vdwg.mxu0
  %1045 = vmatprep.subr.mxu0 0.0
  %v1046 = vand.u32 %v678, 4294901760
  %1047 = vmatpush1.msra.mxu0 %v1046
  %1048 = vmatprep.subr.mxu0 0.0
  %v1049 = vand.u32 %v679, 4294901760
  %1050 = vmatpush1.msra.mxu0 %v1049
  %1051 = vmatprep.subr.mxu0 0.0
  %v1052 = vand.u32 %v680, 4294901760
  %1053 = vmatpush1.msra.mxu0 %v1052
  %1054 = vmatprep.subr.mxu0 0.0
  %v1055 = vand.u32 %v681, 4294901760
  %1056 = vmatpush1.msra.mxu0 %v1055
  %1057 = vmatprep.subr.mxu0 0.0
  %v1058 = vand.u32 %v682, 4294901760
  %1059 = vmatpush1.msra.mxu0 %v1058
  %1060 = vmatprep.subr.mxu0 0.0
  %v1061 = vand.u32 %v683, 4294901760
  %1062 = vmatpush1.msra.mxu0 %v1061
  %1063 = vmatprep.subr.mxu0 0.0
  %v1064 = vand.u32 %v684, 4294901760
  %1065 = vmatpush1.msra.mxu0 %v1064
  %1066 = vmatprep.subr.mxu0 0.0
  %v1067 = vand.u32 %v685, 4294901760
  %1068 = vmatpush1.msra.mxu0 %v1067
  %1069 = vmatprep.subr.mxu0 0.0
  %v1070 = vand.u32 %v686, 4294901760
  %1071 = vmatpush1.msra.mxu0 %v1070
  %1072 = vmatprep.subr.mxu0 0.0
  %v1073 = vand.u32 %v687, 4294901760
  %1074 = vmatpush1.msra.mxu0 %v1073
  %1075 = vmatprep.subr.mxu0 0.0
  %v1076 = vand.u32 %v688, 4294901760
  %1077 = vmatpush1.msra.mxu0 %v1076
  %1078 = vmatprep.subr.mxu0 0.0
  %v1079 = vand.u32 %v689, 4294901760
  %1080 = vmatpush1.msra.mxu0 %v1079
  %1081 = vmatprep.subr.mxu0 0.0
  %v1082 = vand.u32 %v690, 4294901760
  %1083 = vmatpush1.msra.mxu0 %v1082
  %1084 = vmatprep.subr.mxu0 0.0
  %v1085 = vand.u32 %v691, 4294901760
  %1086 = vmatpush1.msra.mxu0 %v1085
  %1087 = vmatprep.subr.mxu0 0.0
  %v1088 = vand.u32 %v692, 4294901760
  %1089 = vmatpush1.msra.mxu0 %v1088
  %1090 = vmatprep.subr.mxu0 0.0
  %v1091 = vand.u32 %v693, 4294901760
  %1092 = vmatpush1.msra.mxu0 %v1091
  %1093 = vmatprep.subr.mxu0 0.0
  %1094 = vmatpush1.msra.mxu0 0.0
  %1095 = vmatprep.subr.mxu0 0.0
  %1096 = vmatpush1.msra.mxu0 0.0
  %1097 = vmatprep.subr.mxu0 0.0
  %1098 = vmatpush1.msra.mxu0 0.0
  %1099 = vmatprep.subr.mxu0 0.0
  %1100 = vmatpush1.msra.mxu0 0.0
  %1101 = vmatprep.subr.mxu0 0.0
  %1102 = vmatpush1.msra.mxu0 0.0
  %1103 = vmatprep.subr.mxu0 0.0
  %1104 = vmatpush1.msra.mxu0 0.0
  %1105 = vmatprep.subr.mxu0 0.0
  %1106 = vmatpush1.msra.mxu0 0.0
  %1107 = vmatprep.subr.mxu0 0.0
  %1108 = vmatpush1.msra.mxu0 0.0
  %1109 = vmatprep.subr.mxu0 0.0
  %1110 = vmatpush1.msra.mxu0 0.0
  %1111 = vmatprep.subr.mxu0 0.0
  %1112 = vmatpush1.msra.mxu0 0.0
  %1113 = vmatprep.subr.mxu0 0.0
  %1114 = vmatpush1.msra.mxu0 0.0
  %1115 = vmatprep.subr.mxu0 0.0
  %1116 = vmatpush1.msra.mxu0 0.0
  %1117 = vmatprep.subr.mxu0 0.0
  %1118 = vmatpush1.msra.mxu0 0.0
  %1119 = vmatprep.subr.mxu0 0.0
  %1120 = vmatpush1.msra.mxu0 0.0
  %1121 = vmatprep.subr.mxu0 0.0
  %1122 = vmatpush1.msra.mxu0 0.0
  %1123 = vmatprep.subr.mxu0 0.0
  %1124 = vmatpush1.msra.mxu0 0.0
  %1125 = vmatprep.mubr.f32.mxu0 0.0
  %v1126 = vand.u32 %v676, 4294901760
  %v1127 = vsub.f32 %v676, %v1126
  %v1128 = vand.u32 %v1127, 4294901760
  %1129 = vmatmul.mubr.f32.gmra.mrb[0].mxu0 %v1128
  %v1130 = vpop.f32.mrb[0].mxu0
  %v1131 = vadd.f32 %v1042, %v1130
  %v1132 = vpop.f32.mrb[0].mxu0
  %1133 = vdwg.mxu0
  %1134 = vmatprep.subr.mxu0 0.0
  %v1135 = vand.u32 %v678, 4294901760
  %v1136 = vsub.f32 %v678, %v1135
  %v1137 = vand.u32 %v1136, 4294901760
  %1138 = vmatpush1.msra.mxu0 %v1137
  %1139 = vmatprep.subr.mxu0 0.0
  %v1140 = vand.u32 %v679, 4294901760
  %v1141 = vsub.f32 %v679, %v1140
  %v1142 = vand.u32 %v1141, 4294901760
  %1143 = vmatpush1.msra.mxu0 %v1142
  %1144 = vmatprep.subr.mxu0 0.0
  %v1145 = vand.u32 %v680, 4294901760
  %v1146 = vsub.f32 %v680, %v1145
  %v1147 = vand.u32 %v1146, 4294901760
  %1148 = vmatpush1.msra.mxu0 %v1147
  %1149 = vmatprep.subr.mxu0 0.0
  %v1150 = vand.u32 %v681, 4294901760
  %v1151 = vsub.f32 %v681, %v1150
  %v1152 = vand.u32 %v1151, 4294901760
  %1153 = vmatpush1.msra.mxu0 %v1152
  %1154 = vmatprep.subr.mxu0 0.0
  %v1155 = vand.u32 %v682, 4294901760
  %v1156 = vsub.f32 %v682, %v1155
  %v1157 = vand.u32 %v1156, 4294901760
  %1158 = vmatpush1.msra.mxu0 %v1157
  %1159 = vmatprep.subr.mxu0 0.0
  %v1160 = vand.u32 %v683, 4294901760
  %v1161 = vsub.f32 %v683, %v1160
  %v1162 = vand.u32 %v1161, 4294901760
  %1163 = vmatpush1.msra.mxu0 %v1162
  %1164 = vmatprep.subr.mxu0 0.0
  %v1165 = vand.u32 %v684, 4294901760
  %v1166 = vsub.f32 %v684, %v1165
  %v1167 = vand.u32 %v1166, 4294901760
  %1168 = vmatpush1.msra.mxu0 %v1167
  %1169 = vmatprep.subr.mxu0 0.0
  %v1170 = vand.u32 %v685, 4294901760
  %v1171 = vsub.f32 %v685, %v1170
  %v1172 = vand.u32 %v1171, 4294901760
  %1173 = vmatpush1.msra.mxu0 %v1172
  %1174 = vmatprep.subr.mxu0 0.0
  %v1175 = vand.u32 %v686, 4294901760
  %v1176 = vsub.f32 %v686, %v1175
  %v1177 = vand.u32 %v1176, 4294901760
  %1178 = vmatpush1.msra.mxu0 %v1177
  %1179 = vmatprep.subr.mxu0 0.0
  %v1180 = vand.u32 %v687, 4294901760
  %v1181 = vsub.f32 %v687, %v1180
  %v1182 = vand.u32 %v1181, 4294901760
  %1183 = vmatpush1.msra.mxu0 %v1182
  %1184 = vmatprep.subr.mxu0 0.0
  %v1185 = vand.u32 %v688, 4294901760
  %v1186 = vsub.f32 %v688, %v1185
  %v1187 = vand.u32 %v1186, 4294901760
  %1188 = vmatpush1.msra.mxu0 %v1187
  %1189 = vmatprep.subr.mxu0 0.0
  %v1190 = vand.u32 %v689, 4294901760
  %v1191 = vsub.f32 %v689, %v1190
  %v1192 = vand.u32 %v1191, 4294901760
  %1193 = vmatpush1.msra.mxu0 %v1192
  %1194 = vmatprep.subr.mxu0 0.0
  %v1195 = vand.u32 %v690, 4294901760
  %v1196 = vsub.f32 %v690, %v1195
  %v1197 = vand.u32 %v1196, 4294901760
  %1198 = vmatpush1.msra.mxu0 %v1197
  %1199 = vmatprep.subr.mxu0 0.0
  %v1200 = vand.u32 %v691, 4294901760
  %v1201 = vsub.f32 %v691, %v1200
  %v1202 = vand.u32 %v1201, 4294901760
  %1203 = vmatpush1.msra.mxu0 %v1202
  %1204 = vmatprep.subr.mxu0 0.0
  %v1205 = vand.u32 %v692, 4294901760
  %v1206 = vsub.f32 %v692, %v1205
  %v1207 = vand.u32 %v1206, 4294901760
  %1208 = vmatpush1.msra.mxu0 %v1207
  %1209 = vmatprep.subr.mxu0 0.0
  %v1210 = vand.u32 %v693, 4294901760
  %v1211 = vsub.f32 %v693, %v1210
  %v1212 = vand.u32 %v1211, 4294901760
  %1213 = vmatpush1.msra.mxu0 %v1212
  %1214 = vmatprep.subr.mxu0 0.0
  %1215 = vmatpush1.msra.mxu0 0.0
  %1216 = vmatprep.subr.mxu0 0.0
  %1217 = vmatpush1.msra.mxu0 0.0
  %1218 = vmatprep.subr.mxu0 0.0
  %1219 = vmatpush1.msra.mxu0 0.0
  %1220 = vmatprep.subr.mxu0 0.0
  %1221 = vmatpush1.msra.mxu0 0.0
  %1222 = vmatprep.subr.mxu0 0.0
  %1223 = vmatpush1.msra.mxu0 0.0
  %1224 = vmatprep.subr.mxu0 0.0
  %1225 = vmatpush1.msra.mxu0 0.0
  %1226 = vmatprep.subr.mxu0 0.0
  %1227 = vmatpush1.msra.mxu0 0.0
  %1228 = vmatprep.subr.mxu0 0.0
  %1229 = vmatpush1.msra.mxu0 0.0
  %1230 = vmatprep.subr.mxu0 0.0
  %1231 = vmatpush1.msra.mxu0 0.0
  %1232 = vmatprep.subr.mxu0 0.0
  %1233 = vmatpush1.msra.mxu0 0.0
  %1234 = vmatprep.subr.mxu0 0.0
  %1235 = vmatpush1.msra.mxu0 0.0
  %1236 = vmatprep.subr.mxu0 0.0
  %1237 = vmatpush1.msra.mxu0 0.0
  %1238 = vmatprep.subr.mxu0 0.0
  %1239 = vmatpush1.msra.mxu0 0.0
  %1240 = vmatprep.subr.mxu0 0.0
  %1241 = vmatpush1.msra.mxu0 0.0
  %1242 = vmatprep.subr.mxu0 0.0
  %1243 = vmatpush1.msra.mxu0 0.0
  %1244 = vmatprep.subr.mxu0 0.0
  %1245 = vmatpush1.msra.mxu0 0.0
  %1246 = vmatprep.mubr.f32.mxu0 0.0
  %v1247 = vand.u32 %v676, 4294901760
  %1248 = vmatmul.mubr.f32.gmra.mrb[0].mxu0 %v1247
  %v1249 = vpop.f32.mrb[0].mxu0
  %v1250 = vadd.f32 %v1131, %v1249
  %v1251 = vpop.f32.mrb[0].mxu0
  %1252 = vdwg.mxu0
  %1253 = vmatprep.subr.mxu0 0.0
  %v1254 = vand.u32 %v678, 4294901760
  %1255 = vmatpush1.msra.mxu0 %v1254
  %1256 = vmatprep.subr.mxu0 0.0
  %v1257 = vand.u32 %v679, 4294901760
  %1258 = vmatpush1.msra.mxu0 %v1257
  %1259 = vmatprep.subr.mxu0 0.0
  %v1260 = vand.u32 %v680, 4294901760
  %1261 = vmatpush1.msra.mxu0 %v1260
  %1262 = vmatprep.subr.mxu0 0.0
  %v1263 = vand.u32 %v681, 4294901760
  %1264 = vmatpush1.msra.mxu0 %v1263
  %1265 = vmatprep.subr.mxu0 0.0
  %v1266 = vand.u32 %v682, 4294901760
  %1267 = vmatpush1.msra.mxu0 %v1266
  %1268 = vmatprep.subr.mxu0 0.0
  %v1269 = vand.u32 %v683, 4294901760
  %1270 = vmatpush1.msra.mxu0 %v1269
  %1271 = vmatprep.subr.mxu0 0.0
  %v1272 = vand.u32 %v684, 4294901760
  %1273 = vmatpush1.msra.mxu0 %v1272
  %1274 = vmatprep.subr.mxu0 0.0
  %v1275 = vand.u32 %v685, 4294901760
  %1276 = vmatpush1.msra.mxu0 %v1275
  %1277 = vmatprep.subr.mxu0 0.0
  %v1278 = vand.u32 %v686, 4294901760
  %1279 = vmatpush1.msra.mxu0 %v1278
  %1280 = vmatprep.subr.mxu0 0.0
  %v1281 = vand.u32 %v687, 4294901760
  %1282 = vmatpush1.msra.mxu0 %v1281
  %1283 = vmatprep.subr.mxu0 0.0
  %v1284 = vand.u32 %v688, 4294901760
  %1285 = vmatpush1.msra.mxu0 %v1284
  %1286 = vmatprep.subr.mxu0 0.0
  %v1287 = vand.u32 %v689, 4294901760
  %1288 = vmatpush1.msra.mxu0 %v1287
  %1289 = vmatprep.subr.mxu0 0.0
  %v1290 = vand.u32 %v690, 4294901760
  %1291 = vmatpush1.msra.mxu0 %v1290
  %1292 = vmatprep.subr.mxu0 0.0
  %v1293 = vand.u32 %v691, 4294901760
  %1294 = vmatpush1.msra.mxu0 %v1293
  %1295 = vmatprep.subr.mxu0 0.0
  %v1296 = vand.u32 %v692, 4294901760
  %1297 = vmatpush1.msra.mxu0 %v1296
  %1298 = vmatprep.subr.mxu0 0.0
  %v1299 = vand.u32 %v693, 4294901760
  %1300 = vmatpush1.msra.mxu0 %v1299
  %1301 = vmatprep.subr.mxu0 0.0
  %1302 = vmatpush1.msra.mxu0 0.0
  %1303 = vmatprep.subr.mxu0 0.0
  %1304 = vmatpush1.msra.mxu0 0.0
  %1305 = vmatprep.subr.mxu0 0.0
  %1306 = vmatpush1.msra.mxu0 0.0
  %1307 = vmatprep.subr.mxu0 0.0
  %1308 = vmatpush1.msra.mxu0 0.0
  %1309 = vmatprep.subr.mxu0 0.0
  %1310 = vmatpush1.msra.mxu0 0.0
  %1311 = vmatprep.subr.mxu0 0.0
  %1312 = vmatpush1.msra.mxu0 0.0
  %1313 = vmatprep.subr.mxu0 0.0
  %1314 = vmatpush1.msra.mxu0 0.0
  %1315 = vmatprep.subr.mxu0 0.0
  %1316 = vmatpush1.msra.mxu0 0.0
  %1317 = vmatprep.subr.mxu0 0.0
  %1318 = vmatpush1.msra.mxu0 0.0
  %1319 = vmatprep.subr.mxu0 0.0
  %1320 = vmatpush1.msra.mxu0 0.0
  %1321 = vmatprep.subr.mxu0 0.0
  %1322 = vmatpush1.msra.mxu0 0.0
  %1323 = vmatprep.subr.mxu0 0.0
  %1324 = vmatpush1.msra.mxu0 0.0
  %1325 = vmatprep.subr.mxu0 0.0
  %1326 = vmatpush1.msra.mxu0 0.0
  %1327 = vmatprep.subr.mxu0 0.0
  %1328 = vmatpush1.msra.mxu0 0.0
  %1329 = vmatprep.subr.mxu0 0.0
  %1330 = vmatpush1.msra.mxu0 0.0
  %1331 = vmatprep.subr.mxu0 0.0
  %1332 = vmatpush1.msra.mxu0 0.0
  %1333 = vmatprep.mubr.f32.mxu0 0.0
  %v1334 = vand.u32 %v676, 4294901760
  %1335 = vmatmul.mubr.f32.gmra.mrb[0].mxu0 %v1334
  %v1336 = vpop.f32.mrb[0].mxu0
  %v1337 = vadd.f32 %v1250, %v1336
  %v1338 = vpop.f32.mrb[0].mxu0
  %1339 = vdwg.mxu0
  %vm1340 = vcmp.ge.f32.partialorder %v1337, 0.0
  %v1341 = vmul.f32 %v1337, 0.01
  %v1342 = vsel %vm1340, %v1337, %v1341
  %s1343 = scalar_lea.vmem %s1, 272
  %v1344 = vld [vmem:[%s1343] sm:$0xff]
  %v1345 = vld [vmem:[%s1343 + $0x8] sm:$0xff]
  %v1346 = vld [vmem:[%s1343 + $0x10] sm:$0xff]
  %v1347 = vld [vmem:[%s1343 + $0x18] sm:$0xff]
  %v1348 = vld [vmem:[%s1343 + $0x20] sm:$0xff]
  %v1349 = vld [vmem:[%s1343 + $0x28] sm:$0xff]
  %v1350 = vld [vmem:[%s1343 + $0x30] sm:$0xff]
  %v1351 = vld [vmem:[%s1343 + $0x38] sm:$0xff]
  %v1352 = vld [vmem:[%s1343 + $0x40] sm:$0xff]
  %v1353 = vld [vmem:[%s1343 + $0x48] sm:$0xff]
  %v1354 = vld [vmem:[%s1343 + $0x50] sm:$0xff]
  %v1355 = vld [vmem:[%s1343 + $0x58] sm:$0xff]
  %v1356 = vld [vmem:[%s1343 + $0x60] sm:$0xff]
  %v1357 = vld [vmem:[%s1343 + $0x68] sm:$0xff]
  %v1358 = vld [vmem:[%s1343 + $0x70] sm:$0xff]
  %v1359 = vld [vmem:[%s1343 + $0x78] sm:$0xff]
  %v1360 = vld [vmem:[%s1343 + $0x80] sm:$0x1]
  %v1361 = vlaneseq
  %v1362 = vshrl.u32 %v1361, 7
  %v1363 = vsub.s32 0, %v1362
  %v1364 = vrot.slane %v1360, %v1363
  %1365 = vmatprep.subr.mxu0 0.0
  %v1366 = vand.u32 %v1344, 4294901760
  %1367 = vmatpush1.msra.mxu0 %v1366
  %1368 = vmatprep.subr.mxu0 0.0
  %v1369 = vand.u32 %v1345, 4294901760
  %1370 = vmatpush1.msra.mxu0 %v1369
  %1371 = vmatprep.subr.mxu0 0.0
  %v1372 = vand.u32 %v1346, 4294901760
  %1373 = vmatpush1.msra.mxu0 %v1372
  %1374 = vmatprep.subr.mxu0 0.0
  %v1375 = vand.u32 %v1347, 4294901760
  %1376 = vmatpush1.msra.mxu0 %v1375
  %1377 = vmatprep.subr.mxu0 0.0
  %v1378 = vand.u32 %v1348, 4294901760
  %1379 = vmatpush1.msra.mxu0 %v1378
  %1380 = vmatprep.subr.mxu0 0.0
  %v1381 = vand.u32 %v1349, 4294901760
  %1382 = vmatpush1.msra.mxu0 %v1381
  %1383 = vmatprep.subr.mxu0 0.0
  %v1384 = vand.u32 %v1350, 4294901760
  %1385 = vmatpush1.msra.mxu0 %v1384
  %1386 = vmatprep.subr.mxu0 0.0
  %v1387 = vand.u32 %v1351, 4294901760
  %1388 = vmatpush1.msra.mxu0 %v1387
  %1389 = vmatprep.subr.mxu0 0.0
  %v1390 = vand.u32 %v1352, 4294901760
  %1391 = vmatpush1.msra.mxu0 %v1390
  %1392 = vmatprep.subr.mxu0 0.0
  %v1393 = vand.u32 %v1353, 4294901760
  %1394 = vmatpush1.msra.mxu0 %v1393
  %1395 = vmatprep.subr.mxu0 0.0
  %v1396 = vand.u32 %v1354, 4294901760
  %1397 = vmatpush1.msra.mxu0 %v1396
  %1398 = vmatprep.subr.mxu0 0.0
  %v1399 = vand.u32 %v1355, 4294901760
  %1400 = vmatpush1.msra.mxu0 %v1399
  %1401 = vmatprep.subr.mxu0 0.0
  %v1402 = vand.u32 %v1356, 4294901760
  %1403 = vmatpush1.msra.mxu0 %v1402
  %1404 = vmatprep.subr.mxu0 0.0
  %v1405 = vand.u32 %v1357, 4294901760
  %1406 = vmatpush1.msra.mxu0 %v1405
  %1407 = vmatprep.subr.mxu0 0.0
  %v1408 = vand.u32 %v1358, 4294901760
  %1409 = vmatpush1.msra.mxu0 %v1408
  %1410 = vmatprep.subr.mxu0 0.0
  %v1411 = vand.u32 %v1359, 4294901760
  %1412 = vmatpush1.msra.mxu0 %v1411
  %1413 = vmatprep.subr.mxu0 0.0
  %1414 = vmatpush1.msra.mxu0 0.0
  %1415 = vmatprep.subr.mxu0 0.0
  %1416 = vmatpush1.msra.mxu0 0.0
  %1417 = vmatprep.subr.mxu0 0.0
  %1418 = vmatpush1.msra.mxu0 0.0
  %1419 = vmatprep.subr.mxu0 0.0
  %1420 = vmatpush1.msra.mxu0 0.0
  %1421 = vmatprep.subr.mxu0 0.0
  %1422 = vmatpush1.msra.mxu0 0.0
  %1423 = vmatprep.subr.mxu0 0.0
  %1424 = vmatpush1.msra.mxu0 0.0
  %1425 = vmatprep.subr.mxu0 0.0
  %1426 = vmatpush1.msra.mxu0 0.0
  %1427 = vmatprep.subr.mxu0 0.0
  %1428 = vmatpush1.msra.mxu0 0.0
  %1429 = vmatprep.subr.mxu0 0.0
  %1430 = vmatpush1.msra.mxu0 0.0
  %1431 = vmatprep.subr.mxu0 0.0
  %1432 = vmatpush1.msra.mxu0 0.0
  %1433 = vmatprep.subr.mxu0 0.0
  %1434 = vmatpush1.msra.mxu0 0.0
  %1435 = vmatprep.subr.mxu0 0.0
  %1436 = vmatpush1.msra.mxu0 0.0
  %1437 = vmatprep.subr.mxu0 0.0
  %1438 = vmatpush1.msra.mxu0 0.0
  %1439 = vmatprep.subr.mxu0 0.0
  %1440 = vmatpush1.msra.mxu0 0.0
  %1441 = vmatprep.subr.mxu0 0.0
  %1442 = vmatpush1.msra.mxu0 0.0
  %1443 = vmatprep.subr.mxu0 0.0
  %1444 = vmatpush1.msra.mxu0 0.0
  %1445 = vmatprep.mubr.f32.mxu0 0.0
  %v1446 = vand.u32 %v1342, 4294901760
  %v1447 = vsub.f32 %v1342, %v1446
  %v1448 = vand.u32 %v1447, 4294901760
  %v1449 = vsub.f32 %v1447, %v1448
  %v1450 = vand.u32 %v1449, 4294901760
  %1451 = vmatmul.mubr.f32.gmra.mrb[0].mxu0 %v1450
  %v1452 = vpop.f32.mrb[0].mxu0
  %v1453 = vadd.f32 %v1364, %v1452
  %v1454 = vpop.f32.mrb[0].mxu0
  %1455 = vdwg.mxu0
  %1456 = vmatprep.subr.mxu0 0.0
  %v1457 = vand.u32 %v1344, 4294901760
  %v1458 = vsub.f32 %v1344, %v1457
  %v1459 = vand.u32 %v1458, 4294901760
  %v1460 = vsub.f32 %v1458, %v1459
  %v1461 = vand.u32 %v1460, 4294901760
  %1462 = vmatpush1.msra.mxu0 %v1461
  %1463 = vmatprep.subr.mxu0 0.0
  %v1464 = vand.u32 %v1345, 4294901760
  %v1465 = vsub.f32 %v1345, %v1464
  %v1466 = vand.u32 %v1465, 4294901760
  %v1467 = vsub.f32 %v1465, %v1466
  %v1468 = vand.u32 %v1467, 4294901760
  %1469 = vmatpush1.msra.mxu0 %v1468
  %1470 = vmatprep.subr.mxu0 0.0
  %v1471 = vand.u32 %v1346, 4294901760
  %v1472 = vsub.f32 %v1346, %v1471
  %v1473 = vand.u32 %v1472, 4294901760
  %v1474 = vsub.f32 %v1472, %v1473
  %v1475 = vand.u32 %v1474, 4294901760
  %1476 = vmatpush1.msra.mxu0 %v1475
  %1477 = vmatprep.subr.mxu0 0.0
  %v1478 = vand.u32 %v1347, 4294901760
  %v1479 = vsub.f32 %v1347, %v1478
  %v1480 = vand.u32 %v1479, 4294901760
  %v1481 = vsub.f32 %v1479, %v1480
  %v1482 = vand.u32 %v1481, 4294901760
  %1483 = vmatpush1.msra.mxu0 %v1482
  %1484 = vmatprep.subr.mxu0 0.0
  %v1485 = vand.u32 %v1348, 4294901760
  %v1486 = vsub.f32 %v1348, %v1485
  %v1487 = vand.u32 %v1486, 4294901760
  %v1488 = vsub.f32 %v1486, %v1487
  %v1489 = vand.u32 %v1488, 4294901760
  %1490 = vmatpush1.msra.mxu0 %v1489
  %1491 = vmatprep.subr.mxu0 0.0
  %v1492 = vand.u32 %v1349, 4294901760
  %v1493 = vsub.f32 %v1349, %v1492
  %v1494 = vand.u32 %v1493, 4294901760
  %v1495 = vsub.f32 %v1493, %v1494
  %v1496 = vand.u32 %v1495, 4294901760
  %1497 = vmatpush1.msra.mxu0 %v1496
  %1498 = vmatprep.subr.mxu0 0.0
  %v1499 = vand.u32 %v1350, 4294901760
  %v1500 = vsub.f32 %v1350, %v1499
  %v1501 = vand.u32 %v1500, 4294901760
  %v1502 = vsub.f32 %v1500, %v1501
  %v1503 = vand.u32 %v1502, 4294901760
  %1504 = vmatpush1.msra.mxu0 %v1503
  %1505 = vmatprep.subr.mxu0 0.0
  %v1506 = vand.u32 %v1351, 4294901760
  %v1507 = vsub.f32 %v1351, %v1506
  %v1508 = vand.u32 %v1507, 4294901760
  %v1509 = vsub.f32 %v1507, %v1508
  %v1510 = vand.u32 %v1509, 4294901760
  %1511 = vmatpush1.msra.mxu0 %v1510
  %1512 = vmatprep.subr.mxu0 0.0
  %v1513 = vand.u32 %v1352, 4294901760
  %v1514 = vsub.f32 %v1352, %v1513
  %v1515 = vand.u32 %v1514, 4294901760
  %v1516 = vsub.f32 %v1514, %v1515
  %v1517 = vand.u32 %v1516, 4294901760
  %1518 = vmatpush1.msra.mxu0 %v1517
  %1519 = vmatprep.subr.mxu0 0.0
  %v1520 = vand.u32 %v1353, 4294901760
  %v1521 = vsub.f32 %v1353, %v1520
  %v1522 = vand.u32 %v1521, 4294901760
  %v1523 = vsub.f32 %v1521, %v1522
  %v1524 = vand.u32 %v1523, 4294901760
  %1525 = vmatpush1.msra.mxu0 %v1524
  %1526 = vmatprep.subr.mxu0 0.0
  %v1527 = vand.u32 %v1354, 4294901760
  %v1528 = vsub.f32 %v1354, %v1527
  %v1529 = vand.u32 %v1528, 4294901760
  %v1530 = vsub.f32 %v1528, %v1529
  %v1531 = vand.u32 %v1530, 4294901760
  %1532 = vmatpush1.msra.mxu0 %v1531
  %1533 = vmatprep.subr.mxu0 0.0
  %v1534 = vand.u32 %v1355, 4294901760
  %v1535 = vsub.f32 %v1355, %v1534
  %v1536 = vand.u32 %v1535, 4294901760
  %v1537 = vsub.f32 %v1535, %v1536
  %v1538 = vand.u32 %v1537, 4294901760
  %1539 = vmatpush1.msra.mxu0 %v1538
  %1540 = vmatprep.subr.mxu0 0.0
  %v1541 = vand.u32 %v1356, 4294901760
  %v1542 = vsub.f32 %v1356, %v1541
  %v1543 = vand.u32 %v1542, 4294901760
  %v1544 = vsub.f32 %v1542, %v1543
  %v1545 = vand.u32 %v1544, 4294901760
  %1546 = vmatpush1.msra.mxu0 %v1545
  %1547 = vmatprep.subr.mxu0 0.0
  %v1548 = vand.u32 %v1357, 4294901760
  %v1549 = vsub.f32 %v1357, %v1548
  %v1550 = vand.u32 %v1549, 4294901760
  %v1551 = vsub.f32 %v1549, %v1550
  %v1552 = vand.u32 %v1551, 4294901760
  %1553 = vmatpush1.msra.mxu0 %v1552
  %1554 = vmatprep.subr.mxu0 0.0
  %v1555 = vand.u32 %v1358, 4294901760
  %v1556 = vsub.f32 %v1358, %v1555
  %v1557 = vand.u32 %v1556, 4294901760
  %v1558 = vsub.f32 %v1556, %v1557
  %v1559 = vand.u32 %v1558, 4294901760
  %1560 = vmatpush1.msra.mxu0 %v1559
  %1561 = vmatprep.subr.mxu0 0.0
  %v1562 = vand.u32 %v1359, 4294901760
  %v1563 = vsub.f32 %v1359, %v1562
  %v1564 = vand.u32 %v1563, 4294901760
  %v1565 = vsub.f32 %v1563, %v1564
  %v1566 = vand.u32 %v1565, 4294901760
  %1567 = vmatpush1.msra.mxu0 %v1566
  %1568 = vmatprep.subr.mxu0 0.0
  %1569 = vmatpush1.msra.mxu0 0.0
  %1570 = vmatprep.subr.mxu0 0.0
  %1571 = vmatpush1.msra.mxu0 0.0
  %1572 = vmatprep.subr.mxu0 0.0
  %1573 = vmatpush1.msra.mxu0 0.0
  %1574 = vmatprep.subr.mxu0 0.0
  %1575 = vmatpush1.msra.mxu0 0.0
  %1576 = vmatprep.subr.mxu0 0.0
  %1577 = vmatpush1.msra.mxu0 0.0
  %1578 = vmatprep.subr.mxu0 0.0
  %1579 = vmatpush1.msra.mxu0 0.0
  %1580 = vmatprep.subr.mxu0 0.0
  %1581 = vmatpush1.msra.mxu0 0.0
  %1582 = vmatprep.subr.mxu0 0.0
  %1583 = vmatpush1.msra.mxu0 0.0
  %1584 = vmatprep.subr.mxu0 0.0
  %1585 = vmatpush1.msra.mxu0 0.0
  %1586 = vmatprep.subr.mxu0 0.0
  %1587 = vmatpush1.msra.mxu0 0.0
  %1588 = vmatprep.subr.mxu0 0.0
  %1589 = vmatpush1.msra.mxu0 0.0
  %1590 = vmatprep.subr.mxu0 0.0
  %1591 = vmatpush1.msra.mxu0 0.0
  %1592 = vmatprep.subr.mxu0 0.0
  %1593 = vmatpush1.msra.mxu0 0.0
  %1594 = vmatprep.subr.mxu0 0.0
  %1595 = vmatpush1.msra.mxu0 0.0
  %1596 = vmatprep.subr.mxu0 0.0
  %1597 = vmatpush1.msra.mxu0 0.0
  %1598 = vmatprep.subr.mxu0 0.0
  %1599 = vmatpush1.msra.mxu0 0.0
  %1600 = vmatprep.mubr.f32.mxu0 0.0
  %v1601 = vand.u32 %v1342, 4294901760
  %1602 = vmatmul.mubr.f32.gmra.mrb[0].mxu0 %v1601
  %v1603 = vpop.f32.mrb[0].mxu0
  %v1604 = vadd.f32 %v1453, %v1603
  %v1605 = vpop.f32.mrb[0].mxu0
  %1606 = vdwg.mxu0
  %1607 = vmatprep.subr.mxu0 0.0
  %v1608 = vand.u32 %v1344, 4294901760
  %v1609 = vsub.f32 %v1344, %v1608
  %1610 = vmatpush1.msra.mxu0 %v1609
  %1611 = vmatprep.subr.mxu0 0.0
  %v1612 = vand.u32 %v1345, 4294901760
  %v1613 = vsub.f32 %v1345, %v1612
  %1614 = vmatpush1.msra.mxu0 %v1613
  %1615 = vmatprep.subr.mxu0 0.0
  %v1616 = vand.u32 %v1346, 4294901760
  %v1617 = vsub.f32 %v1346, %v1616
  %1618 = vmatpush1.msra.mxu0 %v1617
  %1619 = vmatprep.subr.mxu0 0.0
  %v1620 = vand.u32 %v1347, 4294901760
  %v1621 = vsub.f32 %v1347, %v1620
  %1622 = vmatpush1.msra.mxu0 %v1621
  %1623 = vmatprep.subr.mxu0 0.0
  %v1624 = vand.u32 %v1348, 4294901760
  %v1625 = vsub.f32 %v1348, %v1624
  %1626 = vmatpush1.msra.mxu0 %v1625
  %1627 = vmatprep.subr.mxu0 0.0
  %v1628 = vand.u32 %v1349, 4294901760
  %v1629 = vsub.f32 %v1349, %v1628
  %1630 = vmatpush1.msra.mxu0 %v1629
  %1631 = vmatprep.subr.mxu0 0.0
  %v1632 = vand.u32 %v1350, 4294901760
  %v1633 = vsub.f32 %v1350, %v1632
  %1634 = vmatpush1.msra.mxu0 %v1633
  %1635 = vmatprep.subr.mxu0 0.0
  %v1636 = vand.u32 %v1351, 4294901760
  %v1637 = vsub.f32 %v1351, %v1636
  %1638 = vmatpush1.msra.mxu0 %v1637
  %1639 = vmatprep.subr.mxu0 0.0
  %v1640 = vand.u32 %v1352, 4294901760
  %v1641 = vsub.f32 %v1352, %v1640
  %1642 = vmatpush1.msra.mxu0 %v1641
  %1643 = vmatprep.subr.mxu0 0.0
  %v1644 = vand.u32 %v1353, 4294901760
  %v1645 = vsub.f32 %v1353, %v1644
  %1646 = vmatpush1.msra.mxu0 %v1645
  %1647 = vmatprep.subr.mxu0 0.0
  %v1648 = vand.u32 %v1354, 4294901760
  %v1649 = vsub.f32 %v1354, %v1648
  %1650 = vmatpush1.msra.mxu0 %v1649
  %1651 = vmatprep.subr.mxu0 0.0
  %v1652 = vand.u32 %v1355, 4294901760
  %v1653 = vsub.f32 %v1355, %v1652
  %1654 = vmatpush1.msra.mxu0 %v1653
  %1655 = vmatprep.subr.mxu0 0.0
  %v1656 = vand.u32 %v1356, 4294901760
  %v1657 = vsub.f32 %v1356, %v1656
  %1658 = vmatpush1.msra.mxu0 %v1657
  %1659 = vmatprep.subr.mxu0 0.0
  %v1660 = vand.u32 %v1357, 4294901760
  %v1661 = vsub.f32 %v1357, %v1660
  %1662 = vmatpush1.msra.mxu0 %v1661
  %1663 = vmatprep.subr.mxu0 0.0
  %v1664 = vand.u32 %v1358, 4294901760
  %v1665 = vsub.f32 %v1358, %v1664
  %1666 = vmatpush1.msra.mxu0 %v1665
  %1667 = vmatprep.subr.mxu0 0.0
  %v1668 = vand.u32 %v1359, 4294901760
  %v1669 = vsub.f32 %v1359, %v1668
  %1670 = vmatpush1.msra.mxu0 %v1669
  %1671 = vmatprep.subr.mxu0 0.0
  %1672 = vmatpush1.msra.mxu0 0.0
  %1673 = vmatprep.subr.mxu0 0.0
  %1674 = vmatpush1.msra.mxu0 0.0
  %1675 = vmatprep.subr.mxu0 0.0
  %1676 = vmatpush1.msra.mxu0 0.0
  %1677 = vmatprep.subr.mxu0 0.0
  %1678 = vmatpush1.msra.mxu0 0.0
  %1679 = vmatprep.subr.mxu0 0.0
  %1680 = vmatpush1.msra.mxu0 0.0
  %1681 = vmatprep.subr.mxu0 0.0
  %1682 = vmatpush1.msra.mxu0 0.0
  %1683 = vmatprep.subr.mxu0 0.0
  %1684 = vmatpush1.msra.mxu0 0.0
  %1685 = vmatprep.subr.mxu0 0.0
  %1686 = vmatpush1.msra.mxu0 0.0
  %1687 = vmatprep.subr.mxu0 0.0
  %1688 = vmatpush1.msra.mxu0 0.0
  %1689 = vmatprep.subr.mxu0 0.0
  %1690 = vmatpush1.msra.mxu0 0.0
  %1691 = vmatprep.subr.mxu0 0.0
  %1692 = vmatpush1.msra.mxu0 0.0
  %1693 = vmatprep.subr.mxu0 0.0
  %1694 = vmatpush1.msra.mxu0 0.0
  %1695 = vmatprep.subr.mxu0 0.0
  %1696 = vmatpush1.msra.mxu0 0.0
  %1697 = vmatprep.subr.mxu0 0.0
  %1698 = vmatpush1.msra.mxu0 0.0
  %1699 = vmatprep.subr.mxu0 0.0
  %1700 = vmatpush1.msra.mxu0 0.0
  %1701 = vmatprep.subr.mxu0 0.0
  %1702 = vmatpush1.msra.mxu0 0.0
  %1703 = vmatprep.mubr.f32.mxu0 0.0
  %v1704 = vand.u32 %v1342, 4294901760
  %v1705 = vsub.f32 %v1342, %v1704
  %1706 = vmatmul.mubr.f32.gmra.mrb[0].mxu0 %v1705
  %v1707 = vpop.f32.mrb[0].mxu0
  %v1708 = vadd.f32 %v1604, %v1707
  %v1709 = vpop.f32.mrb[0].mxu0
  %1710 = vdwg.mxu0
  %1711 = vmatprep.subr.mxu0 0.0
  %v1712 = vand.u32 %v1344, 4294901760
  %1713 = vmatpush1.msra.mxu0 %v1712
  %1714 = vmatprep.subr.mxu0 0.0
  %v1715 = vand.u32 %v1345, 4294901760
  %1716 = vmatpush1.msra.mxu0 %v1715
  %1717 = vmatprep.subr.mxu0 0.0
  %v1718 = vand.u32 %v1346, 4294901760
  %1719 = vmatpush1.msra.mxu0 %v1718
  %1720 = vmatprep.subr.mxu0 0.0
  %v1721 = vand.u32 %v1347, 4294901760
  %1722 = vmatpush1.msra.mxu0 %v1721
  %1723 = vmatprep.subr.mxu0 0.0
  %v1724 = vand.u32 %v1348, 4294901760
  %1725 = vmatpush1.msra.mxu0 %v1724
  %1726 = vmatprep.subr.mxu0 0.0
  %v1727 = vand.u32 %v1349, 4294901760
  %1728 = vmatpush1.msra.mxu0 %v1727
  %1729 = vmatprep.subr.mxu0 0.0
  %v1730 = vand.u32 %v1350, 4294901760
  %1731 = vmatpush1.msra.mxu0 %v1730
  %1732 = vmatprep.subr.mxu0 0.0
  %v1733 = vand.u32 %v1351, 4294901760
  %1734 = vmatpush1.msra.mxu0 %v1733
  %1735 = vmatprep.subr.mxu0 0.0
  %v1736 = vand.u32 %v1352, 4294901760
  %1737 = vmatpush1.msra.mxu0 %v1736
  %1738 = vmatprep.subr.mxu0 0.0
  %v1739 = vand.u32 %v1353, 4294901760
  %1740 = vmatpush1.msra.mxu0 %v1739
  %1741 = vmatprep.subr.mxu0 0.0
  %v1742 = vand.u32 %v1354, 4294901760
  %1743 = vmatpush1.msra.mxu0 %v1742
  %1744 = vmatprep.subr.mxu0 0.0
  %v1745 = vand.u32 %v1355, 4294901760
  %1746 = vmatpush1.msra.mxu0 %v1745
  %1747 = vmatprep.subr.mxu0 0.0
  %v1748 = vand.u32 %v1356, 4294901760
  %1749 = vmatpush1.msra.mxu0 %v1748
  %1750 = vmatprep.subr.mxu0 0.0
  %v1751 = vand.u32 %v1357, 4294901760
  %1752 = vmatpush1.msra.mxu0 %v1751
  %1753 = vmatprep.subr.mxu0 0.0
  %v1754 = vand.u32 %v1358, 4294901760
  %1755 = vmatpush1.msra.mxu0 %v1754
  %1756 = vmatprep.subr.mxu0 0.0
  %v1757 = vand.u32 %v1359, 4294901760
  %1758 = vmatpush1.msra.mxu0 %v1757
  %1759 = vmatprep.subr.mxu0 0.0
  %1760 = vmatpush1.msra.mxu0 0.0
  %1761 = vmatprep.subr.mxu0 0.0
  %1762 = vmatpush1.msra.mxu0 0.0
  %1763 = vmatprep.subr.mxu0 0.0
  %1764 = vmatpush1.msra.mxu0 0.0
  %1765 = vmatprep.subr.mxu0 0.0
  %1766 = vmatpush1.msra.mxu0 0.0
  %1767 = vmatprep.subr.mxu0 0.0
  %1768 = vmatpush1.msra.mxu0 0.0
  %1769 = vmatprep.subr.mxu0 0.0
  %1770 = vmatpush1.msra.mxu0 0.0
  %1771 = vmatprep.subr.mxu0 0.0
  %1772 = vmatpush1.msra.mxu0 0.0
  %1773 = vmatprep.subr.mxu0 0.0
  %1774 = vmatpush1.msra.mxu0 0.0
  %1775 = vmatprep.subr.mxu0 0.0
  %1776 = vmatpush1.msra.mxu0 0.0
  %1777 = vmatprep.subr.mxu0 0.0
  %1778 = vmatpush1.msra.mxu0 0.0
  %1779 = vmatprep.subr.mxu0 0.0
  %1780 = vmatpush1.msra.mxu0 0.0
  %1781 = vmatprep.subr.mxu0 0.0
  %1782 = vmatpush1.msra.mxu0 0.0
  %1783 = vmatprep.subr.mxu0 0.0
  %1784 = vmatpush1.msra.mxu0 0.0
  %1785 = vmatprep.subr.mxu0 0.0
  %1786 = vmatpush1.msra.mxu0 0.0
  %1787 = vmatprep.subr.mxu0 0.0
  %1788 = vmatpush1.msra.mxu0 0.0
  %1789 = vmatprep.subr.mxu0 0.0
  %1790 = vmatpush1.msra.mxu0 0.0
  %1791 = vmatprep.mubr.f32.mxu0 0.0
  %v1792 = vand.u32 %v1342, 4294901760
  %v1793 = vsub.f32 %v1342, %v1792
  %v1794 = vand.u32 %v1793, 4294901760
  %1795 = vmatmul.mubr.f32.gmra.mrb[0].mxu0 %v1794
  %v1796 = vpop.f32.mrb[0].mxu0
  %v1797 = vadd.f32 %v1708, %v1796
  %v1798 = vpop.f32.mrb[0].mxu0
  %1799 = vdwg.mxu0
  %1800 = vmatprep.subr.mxu0 0.0
  %v1801 = vand.u32 %v1344, 4294901760
  %v1802 = vsub.f32 %v1344, %v1801
  %v1803 = vand.u32 %v1802, 4294901760
  %1804 = vmatpush1.msra.mxu0 %v1803
  %1805 = vmatprep.subr.mxu0 0.0
  %v1806 = vand.u32 %v1345, 4294901760
  %v1807 = vsub.f32 %v1345, %v1806
  %v1808 = vand.u32 %v1807, 4294901760
  %1809 = vmatpush1.msra.mxu0 %v1808
  %1810 = vmatprep.subr.mxu0 0.0
  %v1811 = vand.u32 %v1346, 4294901760
  %v1812 = vsub.f32 %v1346, %v1811
  %v1813 = vand.u32 %v1812, 4294901760
  %1814 = vmatpush1.msra.mxu0 %v1813
  %1815 = vmatprep.subr.mxu0 0.0
  %v1816 = vand.u32 %v1347, 4294901760
  %v1817 = vsub.f32 %v1347, %v1816
  %v1818 = vand.u32 %v1817, 4294901760
  %1819 = vmatpush1.msra.mxu0 %v1818
  %1820 = vmatprep.subr.mxu0 0.0
  %v1821 = vand.u32 %v1348, 4294901760
  %v1822 = vsub.f32 %v1348, %v1821
  %v1823 = vand.u32 %v1822, 4294901760
  %1824 = vmatpush1.msra.mxu0 %v1823
  %1825 = vmatprep.subr.mxu0 0.0
  %v1826 = vand.u32 %v1349, 4294901760
  %v1827 = vsub.f32 %v1349, %v1826
  %v1828 = vand.u32 %v1827, 4294901760
  %1829 = vmatpush1.msra.mxu0 %v1828
  %1830 = vmatprep.subr.mxu0 0.0
  %v1831 = vand.u32 %v1350, 4294901760
  %v1832 = vsub.f32 %v1350, %v1831
  %v1833 = vand.u32 %v1832, 4294901760
  %1834 = vmatpush1.msra.mxu0 %v1833
  %1835 = vmatprep.subr.mxu0 0.0
  %v1836 = vand.u32 %v1351, 4294901760
  %v1837 = vsub.f32 %v1351, %v1836
  %v1838 = vand.u32 %v1837, 4294901760
  %1839 = vmatpush1.msra.mxu0 %v1838
  %1840 = vmatprep.subr.mxu0 0.0
  %v1841 = vand.u32 %v1352, 4294901760
  %v1842 = vsub.f32 %v1352, %v1841
  %v1843 = vand.u32 %v1842, 4294901760
  %1844 = vmatpush1.msra.mxu0 %v1843
  %1845 = vmatprep.subr.mxu0 0.0
  %v1846 = vand.u32 %v1353, 4294901760
  %v1847 = vsub.f32 %v1353, %v1846
  %v1848 = vand.u32 %v1847, 4294901760
  %1849 = vmatpush1.msra.mxu0 %v1848
  %1850 = vmatprep.subr.mxu0 0.0
  %v1851 = vand.u32 %v1354, 4294901760
  %v1852 = vsub.f32 %v1354, %v1851
  %v1853 = vand.u32 %v1852, 4294901760
  %1854 = vmatpush1.msra.mxu0 %v1853
  %1855 = vmatprep.subr.mxu0 0.0
  %v1856 = vand.u32 %v1355, 4294901760
  %v1857 = vsub.f32 %v1355, %v1856
  %v1858 = vand.u32 %v1857, 4294901760
  %1859 = vmatpush1.msra.mxu0 %v1858
  %1860 = vmatprep.subr.mxu0 0.0
  %v1861 = vand.u32 %v1356, 4294901760
  %v1862 = vsub.f32 %v1356, %v1861
  %v1863 = vand.u32 %v1862, 4294901760
  %1864 = vmatpush1.msra.mxu0 %v1863
  %1865 = vmatprep.subr.mxu0 0.0
  %v1866 = vand.u32 %v1357, 4294901760
  %v1867 = vsub.f32 %v1357, %v1866
  %v1868 = vand.u32 %v1867, 4294901760
  %1869 = vmatpush1.msra.mxu0 %v1868
  %1870 = vmatprep.subr.mxu0 0.0
  %v1871 = vand.u32 %v1358, 4294901760
  %v1872 = vsub.f32 %v1358, %v1871
  %v1873 = vand.u32 %v1872, 4294901760
  %1874 = vmatpush1.msra.mxu0 %v1873
  %1875 = vmatprep.subr.mxu0 0.0
  %v1876 = vand.u32 %v1359, 4294901760
  %v1877 = vsub.f32 %v1359, %v1876
  %v1878 = vand.u32 %v1877, 4294901760
  %1879 = vmatpush1.msra.mxu0 %v1878
  %1880 = vmatprep.subr.mxu0 0.0
  %1881 = vmatpush1.msra.mxu0 0.0
  %1882 = vmatprep.subr.mxu0 0.0
  %1883 = vmatpush1.msra.mxu0 0.0
  %1884 = vmatprep.subr.mxu0 0.0
  %1885 = vmatpush1.msra.mxu0 0.0
  %1886 = vmatprep.subr.mxu0 0.0
  %1887 = vmatpush1.msra.mxu0 0.0
  %1888 = vmatprep.subr.mxu0 0.0
  %1889 = vmatpush1.msra.mxu0 0.0
  %1890 = vmatprep.subr.mxu0 0.0
  %1891 = vmatpush1.msra.mxu0 0.0
  %1892 = vmatprep.subr.mxu0 0.0
  %1893 = vmatpush1.msra.mxu0 0.0
  %1894 = vmatprep.subr.mxu0 0.0
  %1895 = vmatpush1.msra.mxu0 0.0
  %1896 = vmatprep.subr.mxu0 0.0
  %1897 = vmatpush1.msra.mxu0 0.0
  %1898 = vmatprep.subr.mxu0 0.0
  %1899 = vmatpush1.msra.mxu0 0.0
  %1900 = vmatprep.subr.mxu0 0.0
  %1901 = vmatpush1.msra.mxu0 0.0
  %1902 = vmatprep.subr.mxu0 0.0
  %1903 = vmatpush1.msra.mxu0 0.0
  %1904 = vmatprep.subr.mxu0 0.0
  %1905 = vmatpush1.msra.mxu0 0.0
  %1906 = vmatprep.subr.mxu0 0.0
  %1907 = vmatpush1.msra.mxu0 0.0
  %1908 = vmatprep.subr.mxu0 0.0
  %1909 = vmatpush1.msra.mxu0 0.0
  %1910 = vmatprep.subr.mxu0 0.0
  %1911 = vmatpush1.msra.mxu0 0.0
  %1912 = vmatprep.mubr.f32.mxu0 0.0
  %v1913 = vand.u32 %v1342, 4294901760
  %1914 = vmatmul.mubr.f32.gmra.mrb[0].mxu0 %v1913
  %v1915 = vpop.f32.mrb[0].mxu0
  %v1916 = vadd.f32 %v1797, %v1915
  %v1917 = vpop.f32.mrb[0].mxu0
  %1918 = vdwg.mxu0
  %1919 = vmatprep.subr.mxu0 0.0
  %v1920 = vand.u32 %v1344, 4294901760
  %1921 = vmatpush1.msra.mxu0 %v1920
  %1922 = vmatprep.subr.mxu0 0.0
  %v1923 = vand.u32 %v1345, 4294901760
  %1924 = vmatpush1.msra.mxu0 %v1923
  %1925 = vmatprep.subr.mxu0 0.0
  %v1926 = vand.u32 %v1346, 4294901760
  %1927 = vmatpush1.msra.mxu0 %v1926
  %1928 = vmatprep.subr.mxu0 0.0
  %v1929 = vand.u32 %v1347, 4294901760
  %1930 = vmatpush1.msra.mxu0 %v1929
  %1931 = vmatprep.subr.mxu0 0.0
  %v1932 = vand.u32 %v1348, 4294901760
  %1933 = vmatpush1.msra.mxu0 %v1932
  %1934 = vmatprep.subr.mxu0 0.0
  %v1935 = vand.u32 %v1349, 4294901760
  %1936 = vmatpush1.msra.mxu0 %v1935
  %1937 = vmatprep.subr.mxu0 0.0
  %v1938 = vand.u32 %v1350, 4294901760
  %1939 = vmatpush1.msra.mxu0 %v1938
  %1940 = vmatprep.subr.mxu0 0.0
  %v1941 = vand.u32 %v1351, 4294901760
  %1942 = vmatpush1.msra.mxu0 %v1941
  %1943 = vmatprep.subr.mxu0 0.0
  %v1944 = vand.u32 %v1352, 4294901760
  %1945 = vmatpush1.msra.mxu0 %v1944
  %1946 = vmatprep.subr.mxu0 0.0
  %v1947 = vand.u32 %v1353, 4294901760
  %1948 = vmatpush1.msra.mxu0 %v1947
  %1949 = vmatprep.subr.mxu0 0.0
  %v1950 = vand.u32 %v1354, 4294901760
  %1951 = vmatpush1.msra.mxu0 %v1950
  %1952 = vmatprep.subr.mxu0 0.0
  %v1953 = vand.u32 %v1355, 4294901760
  %1954 = vmatpush1.msra.mxu0 %v1953
  %1955 = vmatprep.subr.mxu0 0.0
  %v1956 = vand.u32 %v1356, 4294901760
  %1957 = vmatpush1.msra.mxu0 %v1956
  %1958 = vmatprep.subr.mxu0 0.0
  %v1959 = vand.u32 %v1357, 4294901760
  %1960 = vmatpush1.msra.mxu0 %v1959
  %1961 = vmatprep.subr.mxu0 0.0
  %v1962 = vand.u32 %v1358, 4294901760
  %1963 = vmatpush1.msra.mxu0 %v1962
  %1964 = vmatprep.subr.mxu0 0.0
  %v1965 = vand.u32 %v1359, 4294901760
  %1966 = vmatpush1.msra.mxu0 %v1965
  %1967 = vmatprep.subr.mxu0 0.0
  %1968 = vmatpush1.msra.mxu0 0.0
  %1969 = vmatprep.subr.mxu0 0.0
  %1970 = vmatpush1.msra.mxu0 0.0
  %1971 = vmatprep.subr.mxu0 0.0
  %1972 = vmatpush1.msra.mxu0 0.0
  %1973 = vmatprep.subr.mxu0 0.0
  %1974 = vmatpush1.msra.mxu0 0.0
  %1975 = vmatprep.subr.mxu0 0.0
  %1976 = vmatpush1.msra.mxu0 0.0
  %1977 = vmatprep.subr.mxu0 0.0
  %1978 = vmatpush1.msra.mxu0 0.0
  %1979 = vmatprep.subr.mxu0 0.0
  %1980 = vmatpush1.msra.mxu0 0.0
  %1981 = vmatprep.subr.mxu0 0.0
  %1982 = vmatpush1.msra.mxu0 0.0
  %1983 = vmatprep.subr.mxu0 0.0
  %1984 = vmatpush1.msra.mxu0 0.0
  %1985 = vmatprep.subr.mxu0 0.0
  %1986 = vmatpush1.msra.mxu0 0.0
  %1987 = vmatprep.subr.mxu0 0.0
  %1988 = vmatpush1.msra.mxu0 0.0
  %1989 = vmatprep.subr.mxu0 0.0
  %1990 = vmatpush1.msra.mxu0 0.0
  %1991 = vmatprep.subr.mxu0 0.0
  %1992 = vmatpush1.msra.mxu0 0.0
  %1993 = vmatprep.subr.mxu0 0.0
  %1994 = vmatpush1.msra.mxu0 0.0
  %1995 = vmatprep.subr.mxu0 0.0
  %1996 = vmatpush1.msra.mxu0 0.0
  %1997 = vmatprep.subr.mxu0 0.0
  %1998 = vmatpush1.msra.mxu0 0.0
  %1999 = vmatprep.mubr.f32.mxu0 0.0
  %v2000 = vand.u32 %v1342, 4294901760
  %2001 = vmatmul.mubr.f32.gmra.mrb[0].mxu0 %v2000
  %v2002 = vpop.f32.mrb[0].mxu0
  %v2003 = vadd.f32 %v1916, %v2002
  %v2004 = vpop.f32.mrb[0].mxu0
  %2005 = vdwg.mxu0
  %vm2006 = vcmp.ge.f32.partialorder %v2003, 0.0
  %v2007 = vmul.f32 %v2003, 0.01
  %v2008 = vsel %vm2006, %v2003, %v2007
  %s2009 = scalar_lea.vmem %s1, 408
  %v2010 = vld [vmem:[%s2009] sm:$0xff]
  %v2011 = vld [vmem:[%s2009 + $0x8] sm:$0xff]
  %v2012 = vld [vmem:[%s2009 + $0x10] sm:$0xff]
  %v2013 = vld [vmem:[%s2009 + $0x18] sm:$0xff]
  %v2014 = vld [vmem:[%s2009 + $0x20] sm:$0xff]
  %v2015 = vld [vmem:[%s2009 + $0x28] sm:$0xff]
  %v2016 = vld [vmem:[%s2009 + $0x30] sm:$0xff]
  %v2017 = vld [vmem:[%s2009 + $0x38] sm:$0xff]
  %v2018 = vld [vmem:[%s2009 + $0x40] sm:$0xff]
  %v2019 = vld [vmem:[%s2009 + $0x48] sm:$0xff]
  %v2020 = vld [vmem:[%s2009 + $0x50] sm:$0xff]
  %v2021 = vld [vmem:[%s2009 + $0x58] sm:$0xff]
  %v2022 = vld [vmem:[%s2009 + $0x60] sm:$0xff]
  %v2023 = vld [vmem:[%s2009 + $0x68] sm:$0xff]
  %v2024 = vld [vmem:[%s2009 + $0x70] sm:$0xff]
  %v2025 = vld [vmem:[%s2009 + $0x78] sm:$0xff]
  %v2026 = vld [vmem:[%s2009 + $0x80] sm:$0x1]
  %v2027 = vlaneseq
  %v2028 = vshrl.u32 %v2027, 7
  %v2029 = vsub.s32 0, %v2028
  %v2030 = vrot.slane %v2026, %v2029
  %2031 = vmatprep.subr.mxu0 0.0
  %v2032 = vand.u32 %v2010, 4294901760
  %2033 = vmatpush1.msra.mxu0 %v2032
  %2034 = vmatprep.subr.mxu0 0.0
  %v2035 = vand.u32 %v2011, 4294901760
  %2036 = vmatpush1.msra.mxu0 %v2035
  %2037 = vmatprep.subr.mxu0 0.0
  %v2038 = vand.u32 %v2012, 4294901760
  %2039 = vmatpush1.msra.mxu0 %v2038
  %2040 = vmatprep.subr.mxu0 0.0
  %v2041 = vand.u32 %v2013, 4294901760
  %2042 = vmatpush1.msra.mxu0 %v2041
  %2043 = vmatprep.subr.mxu0 0.0
  %v2044 = vand.u32 %v2014, 4294901760
  %2045 = vmatpush1.msra.mxu0 %v2044
  %2046 = vmatprep.subr.mxu0 0.0
  %v2047 = vand.u32 %v2015, 4294901760
  %2048 = vmatpush1.msra.mxu0 %v2047
  %2049 = vmatprep.subr.mxu0 0.0
  %v2050 = vand.u32 %v2016, 4294901760
  %2051 = vmatpush1.msra.mxu0 %v2050
  %2052 = vmatprep.subr.mxu0 0.0
  %v2053 = vand.u32 %v2017, 4294901760
  %2054 = vmatpush1.msra.mxu0 %v2053
  %2055 = vmatprep.subr.mxu0 0.0
  %v2056 = vand.u32 %v2018, 4294901760
  %2057 = vmatpush1.msra.mxu0 %v2056
  %2058 = vmatprep.subr.mxu0 0.0
  %v2059 = vand.u32 %v2019, 4294901760
  %2060 = vmatpush1.msra.mxu0 %v2059
  %2061 = vmatprep.subr.mxu0 0.0
  %v2062 = vand.u32 %v2020, 4294901760
  %2063 = vmatpush1.msra.mxu0 %v2062
  %2064 = vmatprep.subr.mxu0 0.0
  %v2065 = vand.u32 %v2021, 4294901760
  %2066 = vmatpush1.msra.mxu0 %v2065
  %2067 = vmatprep.subr.mxu0 0.0
  %v2068 = vand.u32 %v2022, 4294901760
  %2069 = vmatpush1.msra.mxu0 %v2068
  %2070 = vmatprep.subr.mxu0 0.0
  %v2071 = vand.u32 %v2023, 4294901760
  %2072 = vmatpush1.msra.mxu0 %v2071
  %2073 = vmatprep.subr.mxu0 0.0
  %v2074 = vand.u32 %v2024, 4294901760
  %2075 = vmatpush1.msra.mxu0 %v2074
  %2076 = vmatprep.subr.mxu0 0.0
  %v2077 = vand.u32 %v2025, 4294901760
  %2078 = vmatpush1.msra.mxu0 %v2077
  %2079 = vmatprep.subr.mxu0 0.0
  %2080 = vmatpush1.msra.mxu0 0.0
  %2081 = vmatprep.subr.mxu0 0.0
  %2082 = vmatpush1.msra.mxu0 0.0
  %2083 = vmatprep.subr.mxu0 0.0
  %2084 = vmatpush1.msra.mxu0 0.0
  %2085 = vmatprep.subr.mxu0 0.0
  %2086 = vmatpush1.msra.mxu0 0.0
  %2087 = vmatprep.subr.mxu0 0.0
  %2088 = vmatpush1.msra.mxu0 0.0
  %2089 = vmatprep.subr.mxu0 0.0
  %2090 = vmatpush1.msra.mxu0 0.0
  %2091 = vmatprep.subr.mxu0 0.0
  %2092 = vmatpush1.msra.mxu0 0.0
  %2093 = vmatprep.subr.mxu0 0.0
  %2094 = vmatpush1.msra.mxu0 0.0
  %2095 = vmatprep.subr.mxu0 0.0
  %2096 = vmatpush1.msra.mxu0 0.0
  %2097 = vmatprep.subr.mxu0 0.0
  %2098 = vmatpush1.msra.mxu0 0.0
  %2099 = vmatprep.subr.mxu0 0.0
  %2100 = vmatpush1.msra.mxu0 0.0
  %2101 = vmatprep.subr.mxu0 0.0
  %2102 = vmatpush1.msra.mxu0 0.0
  %2103 = vmatprep.subr.mxu0 0.0
  %2104 = vmatpush1.msra.mxu0 0.0
  %2105 = vmatprep.subr.mxu0 0.0
  %2106 = vmatpush1.msra.mxu0 0.0
  %2107 = vmatprep.subr.mxu0 0.0
  %2108 = vmatpush1.msra.mxu0 0.0
  %2109 = vmatprep.subr.mxu0 0.0
  %2110 = vmatpush1.msra.mxu0 0.0
  %2111 = vmatprep.mubr.f32.mxu0 0.0
  %v2112 = vand.u32 %v2008, 4294901760
  %v2113 = vsub.f32 %v2008, %v2112
  %v2114 = vand.u32 %v2113, 4294901760
  %v2115 = vsub.f32 %v2113, %v2114
  %v2116 = vand.u32 %v2115, 4294901760
  %2117 = vmatmul.mubr.f32.gmra.mrb[0].mxu0 %v2116
  %v2118 = vpop.f32.mrb[0].mxu0
  %v2119 = vadd.f32 %v2030, %v2118
  %v2120 = vpop.f32.mrb[0].mxu0
  %2121 = vdwg.mxu0
  %2122 = vmatprep.subr.mxu0 0.0
  %v2123 = vand.u32 %v2010, 4294901760
  %v2124 = vsub.f32 %v2010, %v2123
  %v2125 = vand.u32 %v2124, 4294901760
  %v2126 = vsub.f32 %v2124, %v2125
  %v2127 = vand.u32 %v2126, 4294901760
  %2128 = vmatpush1.msra.mxu0 %v2127
  %2129 = vmatprep.subr.mxu0 0.0
  %v2130 = vand.u32 %v2011, 4294901760
  %v2131 = vsub.f32 %v2011, %v2130
  %v2132 = vand.u32 %v2131, 4294901760
  %v2133 = vsub.f32 %v2131, %v2132
  %v2134 = vand.u32 %v2133, 4294901760
  %2135 = vmatpush1.msra.mxu0 %v2134
  %2136 = vmatprep.subr.mxu0 0.0
  %v2137 = vand.u32 %v2012, 4294901760
  %v2138 = vsub.f32 %v2012, %v2137
  %v2139 = vand.u32 %v2138, 4294901760
  %v2140 = vsub.f32 %v2138, %v2139
  %v2141 = vand.u32 %v2140, 4294901760
  %2142 = vmatpush1.msra.mxu0 %v2141
  %2143 = vmatprep.subr.mxu0 0.0
  %v2144 = vand.u32 %v2013, 4294901760
  %v2145 = vsub.f32 %v2013, %v2144
  %v2146 = vand.u32 %v2145, 4294901760
  %v2147 = vsub.f32 %v2145, %v2146
  %v2148 = vand.u32 %v2147, 4294901760
  %2149 = vmatpush1.msra.mxu0 %v2148
  %2150 = vmatprep.subr.mxu0 0.0
  %v2151 = vand.u32 %v2014, 4294901760
  %v2152 = vsub.f32 %v2014, %v2151
  %v2153 = vand.u32 %v2152, 4294901760
  %v2154 = vsub.f32 %v2152, %v2153
  %v2155 = vand.u32 %v2154, 4294901760
  %2156 = vmatpush1.msra.mxu0 %v2155
  %2157 = vmatprep.subr.mxu0 0.0
  %v2158 = vand.u32 %v2015, 4294901760
  %v2159 = vsub.f32 %v2015, %v2158
  %v2160 = vand.u32 %v2159, 4294901760
  %v2161 = vsub.f32 %v2159, %v2160
  %v2162 = vand.u32 %v2161, 4294901760
  %2163 = vmatpush1.msra.mxu0 %v2162
  %2164 = vmatprep.subr.mxu0 0.0
  %v2165 = vand.u32 %v2016, 4294901760
  %v2166 = vsub.f32 %v2016, %v2165
  %v2167 = vand.u32 %v2166, 4294901760
  %v2168 = vsub.f32 %v2166, %v2167
  %v2169 = vand.u32 %v2168, 4294901760
  %2170 = vmatpush1.msra.mxu0 %v2169
  %2171 = vmatprep.subr.mxu0 0.0
  %v2172 = vand.u32 %v2017, 4294901760
  %v2173 = vsub.f32 %v2017, %v2172
  %v2174 = vand.u32 %v2173, 4294901760
  %v2175 = vsub.f32 %v2173, %v2174
  %v2176 = vand.u32 %v2175, 4294901760
  %2177 = vmatpush1.msra.mxu0 %v2176
  %2178 = vmatprep.subr.mxu0 0.0
  %v2179 = vand.u32 %v2018, 4294901760
  %v2180 = vsub.f32 %v2018, %v2179
  %v2181 = vand.u32 %v2180, 4294901760
  %v2182 = vsub.f32 %v2180, %v2181
  %v2183 = vand.u32 %v2182, 4294901760
  %2184 = vmatpush1.msra.mxu0 %v2183
  %2185 = vmatprep.subr.mxu0 0.0
  %v2186 = vand.u32 %v2019, 4294901760
  %v2187 = vsub.f32 %v2019, %v2186
  %v2188 = vand.u32 %v2187, 4294901760
  %v2189 = vsub.f32 %v2187, %v2188
  %v2190 = vand.u32 %v2189, 4294901760
  %2191 = vmatpush1.msra.mxu0 %v2190
  %2192 = vmatprep.subr.mxu0 0.0
  %v2193 = vand.u32 %v2020, 4294901760
  %v2194 = vsub.f32 %v2020, %v2193
  %v2195 = vand.u32 %v2194, 4294901760
  %v2196 = vsub.f32 %v2194, %v2195
  %v2197 = vand.u32 %v2196, 4294901760
  %2198 = vmatpush1.msra.mxu0 %v2197
  %2199 = vmatprep.subr.mxu0 0.0
  %v2200 = vand.u32 %v2021, 4294901760
  %v2201 = vsub.f32 %v2021, %v2200
  %v2202 = vand.u32 %v2201, 4294901760
  %v2203 = vsub.f32 %v2201, %v2202
  %v2204 = vand.u32 %v2203, 4294901760
  %2205 = vmatpush1.msra.mxu0 %v2204
  %2206 = vmatprep.subr.mxu0 0.0
  %v2207 = vand.u32 %v2022, 4294901760
  %v2208 = vsub.f32 %v2022, %v2207
  %v2209 = vand.u32 %v2208, 4294901760
  %v2210 = vsub.f32 %v2208, %v2209
  %v2211 = vand.u32 %v2210, 4294901760
  %2212 = vmatpush1.msra.mxu0 %v2211
  %2213 = vmatprep.subr.mxu0 0.0
  %v2214 = vand.u32 %v2023, 4294901760
  %v2215 = vsub.f32 %v2023, %v2214
  %v2216 = vand.u32 %v2215, 4294901760
  %v2217 = vsub.f32 %v2215, %v2216
  %v2218 = vand.u32 %v2217, 4294901760
  %2219 = vmatpush1.msra.mxu0 %v2218
  %2220 = vmatprep.subr.mxu0 0.0
  %v2221 = vand.u32 %v2024, 4294901760
  %v2222 = vsub.f32 %v2024, %v2221
  %v2223 = vand.u32 %v2222, 4294901760
  %v2224 = vsub.f32 %v2222, %v2223
  %v2225 = vand.u32 %v2224, 4294901760
  %2226 = vmatpush1.msra.mxu0 %v2225
  %2227 = vmatprep.subr.mxu0 0.0
  %v2228 = vand.u32 %v2025, 4294901760
  %v2229 = vsub.f32 %v2025, %v2228
  %v2230 = vand.u32 %v2229, 4294901760
  %v2231 = vsub.f32 %v2229, %v2230
  %v2232 = vand.u32 %v2231, 4294901760
  %2233 = vmatpush1.msra.mxu0 %v2232
  %2234 = vmatprep.subr.mxu0 0.0
  %2235 = vmatpush1.msra.mxu0 0.0
  %2236 = vmatprep.subr.mxu0 0.0
  %2237 = vmatpush1.msra.mxu0 0.0
  %2238 = vmatprep.subr.mxu0 0.0
  %2239 = vmatpush1.msra.mxu0 0.0
  %2240 = vmatprep.subr.mxu0 0.0
  %2241 = vmatpush1.msra.mxu0 0.0
  %2242 = vmatprep.subr.mxu0 0.0
  %2243 = vmatpush1.msra.mxu0 0.0
  %2244 = vmatprep.subr.mxu0 0.0
  %2245 = vmatpush1.msra.mxu0 0.0
  %2246 = vmatprep.subr.mxu0 0.0
  %2247 = vmatpush1.msra.mxu0 0.0
  %2248 = vmatprep.subr.mxu0 0.0
  %2249 = vmatpush1.msra.mxu0 0.0
  %2250 = vmatprep.subr.mxu0 0.0
  %2251 = vmatpush1.msra.mxu0 0.0
  %2252 = vmatprep.subr.mxu0 0.0
  %2253 = vmatpush1.msra.mxu0 0.0
  %2254 = vmatprep.subr.mxu0 0.0
  %2255 = vmatpush1.msra.mxu0 0.0
  %2256 = vmatprep.subr.mxu0 0.0
  %2257 = vmatpush1.msra.mxu0 0.0
  %2258 = vmatprep.subr.mxu0 0.0
  %2259 = vmatpush1.msra.mxu0 0.0
  %2260 = vmatprep.subr.mxu0 0.0
  %2261 = vmatpush1.msra.mxu0 0.0
  %2262 = vmatprep.subr.mxu0 0.0
  %2263 = vmatpush1.msra.mxu0 0.0
  %2264 = vmatprep.subr.mxu0 0.0
  %2265 = vmatpush1.msra.mxu0 0.0
  %2266 = vmatprep.mubr.f32.mxu0 0.0
  %v2267 = vand.u32 %v2008, 4294901760
  %2268 = vmatmul.mubr.f32.gmra.mrb[0].mxu0 %v2267
  %v2269 = vpop.f32.mrb[0].mxu0
  %v2270 = vadd.f32 %v2119, %v2269
  %v2271 = vpop.f32.mrb[0].mxu0
  %2272 = vdwg.mxu0
  %2273 = vmatprep.subr.mxu0 0.0
  %v2274 = vand.u32 %v2010, 4294901760
  %v2275 = vsub.f32 %v2010, %v2274
  %2276 = vmatpush1.msra.mxu0 %v2275
  %2277 = vmatprep.subr.mxu0 0.0
  %v2278 = vand.u32 %v2011, 4294901760
  %v2279 = vsub.f32 %v2011, %v2278
  %2280 = vmatpush1.msra.mxu0 %v2279
  %2281 = vmatprep.subr.mxu0 0.0
  %v2282 = vand.u32 %v2012, 4294901760
  %v2283 = vsub.f32 %v2012, %v2282
  %2284 = vmatpush1.msra.mxu0 %v2283
  %2285 = vmatprep.subr.mxu0 0.0
  %v2286 = vand.u32 %v2013, 4294901760
  %v2287 = vsub.f32 %v2013, %v2286
  %2288 = vmatpush1.msra.mxu0 %v2287
  %2289 = vmatprep.subr.mxu0 0.0
  %v2290 = vand.u32 %v2014, 4294901760
  %v2291 = vsub.f32 %v2014, %v2290
  %2292 = vmatpush1.msra.mxu0 %v2291
  %2293 = vmatprep.subr.mxu0 0.0
  %v2294 = vand.u32 %v2015, 4294901760
  %v2295 = vsub.f32 %v2015, %v2294
  %2296 = vmatpush1.msra.mxu0 %v2295
  %2297 = vmatprep.subr.mxu0 0.0
  %v2298 = vand.u32 %v2016, 4294901760
  %v2299 = vsub.f32 %v2016, %v2298
  %2300 = vmatpush1.msra.mxu0 %v2299
  %2301 = vmatprep.subr.mxu0 0.0
  %v2302 = vand.u32 %v2017, 4294901760
  %v2303 = vsub.f32 %v2017, %v2302
  %2304 = vmatpush1.msra.mxu0 %v2303
  %2305 = vmatprep.subr.mxu0 0.0
  %v2306 = vand.u32 %v2018, 4294901760
  %v2307 = vsub.f32 %v2018, %v2306
  %2308 = vmatpush1.msra.mxu0 %v2307
  %2309 = vmatprep.subr.mxu0 0.0
  %v2310 = vand.u32 %v2019, 4294901760
  %v2311 = vsub.f32 %v2019, %v2310
  %2312 = vmatpush1.msra.mxu0 %v2311
  %2313 = vmatprep.subr.mxu0 0.0
  %v2314 = vand.u32 %v2020, 4294901760
  %v2315 = vsub.f32 %v2020, %v2314
  %2316 = vmatpush1.msra.mxu0 %v2315
  %2317 = vmatprep.subr.mxu0 0.0
  %v2318 = vand.u32 %v2021, 4294901760
  %v2319 = vsub.f32 %v2021, %v2318
  %2320 = vmatpush1.msra.mxu0 %v2319
  %2321 = vmatprep.subr.mxu0 0.0
  %v2322 = vand.u32 %v2022, 4294901760
  %v2323 = vsub.f32 %v2022, %v2322
  %2324 = vmatpush1.msra.mxu0 %v2323
  %2325 = vmatprep.subr.mxu0 0.0
  %v2326 = vand.u32 %v2023, 4294901760
  %v2327 = vsub.f32 %v2023, %v2326
  %2328 = vmatpush1.msra.mxu0 %v2327
  %2329 = vmatprep.subr.mxu0 0.0
  %v2330 = vand.u32 %v2024, 4294901760
  %v2331 = vsub.f32 %v2024, %v2330
  %2332 = vmatpush1.msra.mxu0 %v2331
  %2333 = vmatprep.subr.mxu0 0.0
  %v2334 = vand.u32 %v2025, 4294901760
  %v2335 = vsub.f32 %v2025, %v2334
  %2336 = vmatpush1.msra.mxu0 %v2335
  %2337 = vmatprep.subr.mxu0 0.0
  %2338 = vmatpush1.msra.mxu0 0.0
  %2339 = vmatprep.subr.mxu0 0.0
  %2340 = vmatpush1.msra.mxu0 0.0
  %2341 = vmatprep.subr.mxu0 0.0
  %2342 = vmatpush1.msra.mxu0 0.0
  %2343 = vmatprep.subr.mxu0 0.0
  %2344 = vmatpush1.msra.mxu0 0.0
  %2345 = vmatprep.subr.mxu0 0.0
  %2346 = vmatpush1.msra.mxu0 0.0
  %2347 = vmatprep.subr.mxu0 0.0
  %2348 = vmatpush1.msra.mxu0 0.0
  %2349 = vmatprep.subr.mxu0 0.0
  %2350 = vmatpush1.msra.mxu0 0.0
  %2351 = vmatprep.subr.mxu0 0.0
  %2352 = vmatpush1.msra.mxu0 0.0
  %2353 = vmatprep.subr.mxu0 0.0
  %2354 = vmatpush1.msra.mxu0 0.0
  %2355 = vmatprep.subr.mxu0 0.0
  %2356 = vmatpush1.msra.mxu0 0.0
  %2357 = vmatprep.subr.mxu0 0.0
  %2358 = vmatpush1.msra.mxu0 0.0
  %2359 = vmatprep.subr.mxu0 0.0
  %2360 = vmatpush1.msra.mxu0 0.0
  %2361 = vmatprep.subr.mxu0 0.0
  %2362 = vmatpush1.msra.mxu0 0.0
  %2363 = vmatprep.subr.mxu0 0.0
  %2364 = vmatpush1.msra.mxu0 0.0
  %2365 = vmatprep.subr.mxu0 0.0
  %2366 = vmatpush1.msra.mxu0 0.0
  %2367 = vmatprep.subr.mxu0 0.0
  %2368 = vmatpush1.msra.mxu0 0.0
  %2369 = vmatprep.mubr.f32.mxu0 0.0
  %v2370 = vand.u32 %v2008, 4294901760
  %v2371 = vsub.f32 %v2008, %v2370
  %2372 = vmatmul.mubr.f32.gmra.mrb[0].mxu0 %v2371
  %v2373 = vpop.f32.mrb[0].mxu0
  %v2374 = vadd.f32 %v2270, %v2373
  %v2375 = vpop.f32.mrb[0].mxu0
  %2376 = vdwg.mxu0
  %2377 = vmatprep.subr.mxu0 0.0
  %v2378 = vand.u32 %v2010, 4294901760
  %2379 = vmatpush1.msra.mxu0 %v2378
  %2380 = vmatprep.subr.mxu0 0.0
  %v2381 = vand.u32 %v2011, 4294901760
  %2382 = vmatpush1.msra.mxu0 %v2381
  %2383 = vmatprep.subr.mxu0 0.0
  %v2384 = vand.u32 %v2012, 4294901760
  %2385 = vmatpush1.msra.mxu0 %v2384
  %2386 = vmatprep.subr.mxu0 0.0
  %v2387 = vand.u32 %v2013, 4294901760
  %2388 = vmatpush1.msra.mxu0 %v2387
  %2389 = vmatprep.subr.mxu0 0.0
  %v2390 = vand.u32 %v2014, 4294901760
  %2391 = vmatpush1.msra.mxu0 %v2390
  %2392 = vmatprep.subr.mxu0 0.0
  %v2393 = vand.u32 %v2015, 4294901760
  %2394 = vmatpush1.msra.mxu0 %v2393
  %2395 = vmatprep.subr.mxu0 0.0
  %v2396 = vand.u32 %v2016, 4294901760
  %2397 = vmatpush1.msra.mxu0 %v2396
  %2398 = vmatprep.subr.mxu0 0.0
  %v2399 = vand.u32 %v2017, 4294901760
  %2400 = vmatpush1.msra.mxu0 %v2399
  %2401 = vmatprep.subr.mxu0 0.0
  %v2402 = vand.u32 %v2018, 4294901760
  %2403 = vmatpush1.msra.mxu0 %v2402
  %2404 = vmatprep.subr.mxu0 0.0
  %v2405 = vand.u32 %v2019, 4294901760
  %2406 = vmatpush1.msra.mxu0 %v2405
  %2407 = vmatprep.subr.mxu0 0.0
  %v2408 = vand.u32 %v2020, 4294901760
  %2409 = vmatpush1.msra.mxu0 %v2408
  %2410 = vmatprep.subr.mxu0 0.0
  %v2411 = vand.u32 %v2021, 4294901760
  %2412 = vmatpush1.msra.mxu0 %v2411
  %2413 = vmatprep.subr.mxu0 0.0
  %v2414 = vand.u32 %v2022, 4294901760
  %2415 = vmatpush1.msra.mxu0 %v2414
  %2416 = vmatprep.subr.mxu0 0.0
  %v2417 = vand.u32 %v2023, 4294901760
  %2418 = vmatpush1.msra.mxu0 %v2417
  %2419 = vmatprep.subr.mxu0 0.0
  %v2420 = vand.u32 %v2024, 4294901760
  %2421 = vmatpush1.msra.mxu0 %v2420
  %2422 = vmatprep.subr.mxu0 0.0
  %v2423 = vand.u32 %v2025, 4294901760
  %2424 = vmatpush1.msra.mxu0 %v2423
  %2425 = vmatprep.subr.mxu0 0.0
  %2426 = vmatpush1.msra.mxu0 0.0
  %2427 = vmatprep.subr.mxu0 0.0
  %2428 = vmatpush1.msra.mxu0 0.0
  %2429 = vmatprep.subr.mxu0 0.0
  %2430 = vmatpush1.msra.mxu0 0.0
  %2431 = vmatprep.subr.mxu0 0.0
  %2432 = vmatpush1.msra.mxu0 0.0
  %2433 = vmatprep.subr.mxu0 0.0
  %2434 = vmatpush1.msra.mxu0 0.0
  %2435 = vmatprep.subr.mxu0 0.0
  %2436 = vmatpush1.msra.mxu0 0.0
  %2437 = vmatprep.subr.mxu0 0.0
  %2438 = vmatpush1.msra.mxu0 0.0
  %2439 = vmatprep.subr.mxu0 0.0
  %2440 = vmatpush1.msra.mxu0 0.0
  %2441 = vmatprep.subr.mxu0 0.0
  %2442 = vmatpush1.msra.mxu0 0.0
  %2443 = vmatprep.subr.mxu0 0.0
  %2444 = vmatpush1.msra.mxu0 0.0
  %2445 = vmatprep.subr.mxu0 0.0
  %2446 = vmatpush1.msra.mxu0 0.0
  %2447 = vmatprep.subr.mxu0 0.0
  %2448 = vmatpush1.msra.mxu0 0.0
  %2449 = vmatprep.subr.mxu0 0.0
  %2450 = vmatpush1.msra.mxu0 0.0
  %2451 = vmatprep.subr.mxu0 0.0
  %2452 = vmatpush1.msra.mxu0 0.0
  %2453 = vmatprep.subr.mxu0 0.0
  %2454 = vmatpush1.msra.mxu0 0.0
  %2455 = vmatprep.subr.mxu0 0.0
  %2456 = vmatpush1.msra.mxu0 0.0
  %2457 = vmatprep.mubr.f32.mxu0 0.0
  %v2458 = vand.u32 %v2008, 4294901760
  %v2459 = vsub.f32 %v2008, %v2458
  %v2460 = vand.u32 %v2459, 4294901760
  %2461 = vmatmul.mubr.f32.gmra.mrb[0].mxu0 %v2460
  %v2462 = vpop.f32.mrb[0].mxu0
  %v2463 = vadd.f32 %v2374, %v2462
  %v2464 = vpop.f32.mrb[0].mxu0
  %2465 = vdwg.mxu0
  %2466 = vmatprep.subr.mxu0 0.0
  %v2467 = vand.u32 %v2010, 4294901760
  %v2468 = vsub.f32 %v2010, %v2467
  %v2469 = vand.u32 %v2468, 4294901760
  %2470 = vmatpush1.msra.mxu0 %v2469
  %2471 = vmatprep.subr.mxu0 0.0
  %v2472 = vand.u32 %v2011, 4294901760
  %v2473 = vsub.f32 %v2011, %v2472
  %v2474 = vand.u32 %v2473, 4294901760
  %2475 = vmatpush1.msra.mxu0 %v2474
  %2476 = vmatprep.subr.mxu0 0.0
  %v2477 = vand.u32 %v2012, 4294901760
  %v2478 = vsub.f32 %v2012, %v2477
  %v2479 = vand.u32 %v2478, 4294901760
  %2480 = vmatpush1.msra.mxu0 %v2479
  %2481 = vmatprep.subr.mxu0 0.0
  %v2482 = vand.u32 %v2013, 4294901760
  %v2483 = vsub.f32 %v2013, %v2482
  %v2484 = vand.u32 %v2483, 4294901760
  %2485 = vmatpush1.msra.mxu0 %v2484
  %2486 = vmatprep.subr.mxu0 0.0
  %v2487 = vand.u32 %v2014, 4294901760
  %v2488 = vsub.f32 %v2014, %v2487
  %v2489 = vand.u32 %v2488, 4294901760
  %2490 = vmatpush1.msra.mxu0 %v2489
  %2491 = vmatprep.subr.mxu0 0.0
  %v2492 = vand.u32 %v2015, 4294901760
  %v2493 = vsub.f32 %v2015, %v2492
  %v2494 = vand.u32 %v2493, 4294901760
  %2495 = vmatpush1.msra.mxu0 %v2494
  %2496 = vmatprep.subr.mxu0 0.0
  %v2497 = vand.u32 %v2016, 4294901760
  %v2498 = vsub.f32 %v2016, %v2497
  %v2499 = vand.u32 %v2498, 4294901760
  %2500 = vmatpush1.msra.mxu0 %v2499
  %2501 = vmatprep.subr.mxu0 0.0
  %v2502 = vand.u32 %v2017, 4294901760
  %v2503 = vsub.f32 %v2017, %v2502
  %v2504 = vand.u32 %v2503, 4294901760
  %2505 = vmatpush1.msra.mxu0 %v2504
  %2506 = vmatprep.subr.mxu0 0.0
  %v2507 = vand.u32 %v2018, 4294901760
  %v2508 = vsub.f32 %v2018, %v2507
  %v2509 = vand.u32 %v2508, 4294901760
  %2510 = vmatpush1.msra.mxu0 %v2509
  %2511 = vmatprep.subr.mxu0 0.0
  %v2512 = vand.u32 %v2019, 4294901760
  %v2513 = vsub.f32 %v2019, %v2512
  %v2514 = vand.u32 %v2513, 4294901760
  %2515 = vmatpush1.msra.mxu0 %v2514
  %2516 = vmatprep.subr.mxu0 0.0
  %v2517 = vand.u32 %v2020, 4294901760
  %v2518 = vsub.f32 %v2020, %v2517
  %v2519 = vand.u32 %v2518, 4294901760
  %2520 = vmatpush1.msra.mxu0 %v2519
  %2521 = vmatprep.subr.mxu0 0.0
  %v2522 = vand.u32 %v2021, 4294901760
  %v2523 = vsub.f32 %v2021, %v2522
  %v2524 = vand.u32 %v2523, 4294901760
  %2525 = vmatpush1.msra.mxu0 %v2524
  %2526 = vmatprep.subr.mxu0 0.0
  %v2527 = vand.u32 %v2022, 4294901760
  %v2528 = vsub.f32 %v2022, %v2527
  %v2529 = vand.u32 %v2528, 4294901760
  %2530 = vmatpush1.msra.mxu0 %v2529
  %2531 = vmatprep.subr.mxu0 0.0
  %v2532 = vand.u32 %v2023, 4294901760
  %v2533 = vsub.f32 %v2023, %v2532
  %v2534 = vand.u32 %v2533, 4294901760
  %2535 = vmatpush1.msra.mxu0 %v2534
  %2536 = vmatprep.subr.mxu0 0.0
  %v2537 = vand.u32 %v2024, 4294901760
  %v2538 = vsub.f32 %v2024, %v2537
  %v2539 = vand.u32 %v2538, 4294901760
  %2540 = vmatpush1.msra.mxu0 %v2539
  %2541 = vmatprep.subr.mxu0 0.0
  %v2542 = vand.u32 %v2025, 4294901760
  %v2543 = vsub.f32 %v2025, %v2542
  %v2544 = vand.u32 %v2543, 4294901760
  %2545 = vmatpush1.msra.mxu0 %v2544
  %2546 = vmatprep.subr.mxu0 0.0
  %2547 = vmatpush1.msra.mxu0 0.0
  %2548 = vmatprep.subr.mxu0 0.0
  %2549 = vmatpush1.msra.mxu0 0.0
  %2550 = vmatprep.subr.mxu0 0.0
  %2551 = vmatpush1.msra.mxu0 0.0
  %2552 = vmatprep.subr.mxu0 0.0
  %2553 = vmatpush1.msra.mxu0 0.0
  %2554 = vmatprep.subr.mxu0 0.0
  %2555 = vmatpush1.msra.mxu0 0.0
  %2556 = vmatprep.subr.mxu0 0.0
  %2557 = vmatpush1.msra.mxu0 0.0
  %2558 = vmatprep.subr.mxu0 0.0
  %2559 = vmatpush1.msra.mxu0 0.0
  %2560 = vmatprep.subr.mxu0 0.0
  %2561 = vmatpush1.msra.mxu0 0.0
  %2562 = vmatprep.subr.mxu0 0.0
  %2563 = vmatpush1.msra.mxu0 0.0
  %2564 = vmatprep.subr.mxu0 0.0
  %2565 = vmatpush1.msra.mxu0 0.0
  %2566 = vmatprep.subr.mxu0 0.0
  %2567 = vmatpush1.msra.mxu0 0.0
  %2568 = vmatprep.subr.mxu0 0.0
  %2569 = vmatpush1.msra.mxu0 0.0
  %2570 = vmatprep.subr.mxu0 0.0
  %2571 = vmatpush1.msra.mxu0 0.0
  %2572 = vmatprep.subr.mxu0 0.0
  %2573 = vmatpush1.msra.mxu0 0.0
  %2574 = vmatprep.subr.mxu0 0.0
  %2575 = vmatpush1.msra.mxu0 0.0
  %2576 = vmatprep.subr.mxu0 0.0
  %2577 = vmatpush1.msra.mxu0 0.0
  %2578 = vmatprep.mubr.f32.mxu0 0.0
  %v2579 = vand.u32 %v2008, 4294901760
  %2580 = vmatmul.mubr.f32.gmra.mrb[0].mxu0 %v2579
  %v2581 = vpop.f32.mrb[0].mxu0
  %v2582 = vadd.f32 %v2463, %v2581
  %v2583 = vpop.f32.mrb[0].mxu0
  %2584 = vdwg.mxu0
  %2585 = vmatprep.subr.mxu0 0.0
  %v2586 = vand.u32 %v2010, 4294901760
  %2587 = vmatpush1.msra.mxu0 %v2586
  %2588 = vmatprep.subr.mxu0 0.0
  %v2589 = vand.u32 %v2011, 4294901760
  %2590 = vmatpush1.msra.mxu0 %v2589
  %2591 = vmatprep.subr.mxu0 0.0
  %v2592 = vand.u32 %v2012, 4294901760
  %2593 = vmatpush1.msra.mxu0 %v2592
  %2594 = vmatprep.subr.mxu0 0.0
  %v2595 = vand.u32 %v2013, 4294901760
  %2596 = vmatpush1.msra.mxu0 %v2595
  %2597 = vmatprep.subr.mxu0 0.0
  %v2598 = vand.u32 %v2014, 4294901760
  %2599 = vmatpush1.msra.mxu0 %v2598
  %2600 = vmatprep.subr.mxu0 0.0
  %v2601 = vand.u32 %v2015, 4294901760
  %2602 = vmatpush1.msra.mxu0 %v2601
  %2603 = vmatprep.subr.mxu0 0.0
  %v2604 = vand.u32 %v2016, 4294901760
  %2605 = vmatpush1.msra.mxu0 %v2604
  %2606 = vmatprep.subr.mxu0 0.0
  %v2607 = vand.u32 %v2017, 4294901760
  %2608 = vmatpush1.msra.mxu0 %v2607
  %2609 = vmatprep.subr.mxu0 0.0
  %v2610 = vand.u32 %v2018, 4294901760
  %2611 = vmatpush1.msra.mxu0 %v2610
  %2612 = vmatprep.subr.mxu0 0.0
  %v2613 = vand.u32 %v2019, 4294901760
  %2614 = vmatpush1.msra.mxu0 %v2613
  %2615 = vmatprep.subr.mxu0 0.0
  %v2616 = vand.u32 %v2020, 4294901760
  %2617 = vmatpush1.msra.mxu0 %v2616
  %2618 = vmatprep.subr.mxu0 0.0
  %v2619 = vand.u32 %v2021, 4294901760
  %2620 = vmatpush1.msra.mxu0 %v2619
  %2621 = vmatprep.subr.mxu0 0.0
  %v2622 = vand.u32 %v2022, 4294901760
  %2623 = vmatpush1.msra.mxu0 %v2622
  %2624 = vmatprep.subr.mxu0 0.0
  %v2625 = vand.u32 %v2023, 4294901760
  %2626 = vmatpush1.msra.mxu0 %v2625
  %2627 = vmatprep.subr.mxu0 0.0
  %v2628 = vand.u32 %v2024, 4294901760
  %2629 = vmatpush1.msra.mxu0 %v2628
  %2630 = vmatprep.subr.mxu0 0.0
  %v2631 = vand.u32 %v2025, 4294901760
  %2632 = vmatpush1.msra.mxu0 %v2631
  %2633 = vmatprep.subr.mxu0 0.0
  %2634 = vmatpush1.msra.mxu0 0.0
  %2635 = vmatprep.subr.mxu0 0.0
  %2636 = vmatpush1.msra.mxu0 0.0
  %2637 = vmatprep.subr.mxu0 0.0
  %2638 = vmatpush1.msra.mxu0 0.0
  %2639 = vmatprep.subr.mxu0 0.0
  %2640 = vmatpush1.msra.mxu0 0.0
  %2641 = vmatprep.subr.mxu0 0.0
  %2642 = vmatpush1.msra.mxu0 0.0
  %2643 = vmatprep.subr.mxu0 0.0
  %2644 = vmatpush1.msra.mxu0 0.0
  %2645 = vmatprep.subr.mxu0 0.0
  %2646 = vmatpush1.msra.mxu0 0.0
  %2647 = vmatprep.subr.mxu0 0.0
  %2648 = vmatpush1.msra.mxu0 0.0
  %2649 = vmatprep.subr.mxu0 0.0
  %2650 = vmatpush1.msra.mxu0 0.0
  %2651 = vmatprep.subr.mxu0 0.0
  %2652 = vmatpush1.msra.mxu0 0.0
  %2653 = vmatprep.subr.mxu0 0.0
  %2654 = vmatpush1.msra.mxu0 0.0
  %2655 = vmatprep.subr.mxu0 0.0
  %2656 = vmatpush1.msra.mxu0 0.0
  %2657 = vmatprep.subr.mxu0 0.0
  %2658 = vmatpush1.msra.mxu0 0.0
  %2659 = vmatprep.subr.mxu0 0.0
  %2660 = vmatpush1.msra.mxu0 0.0
  %2661 = vmatprep.subr.mxu0 0.0
  %2662 = vmatpush1.msra.mxu0 0.0
  %2663 = vmatprep.subr.mxu0 0.0
  %2664 = vmatpush1.msra.mxu0 0.0
  %2665 = vmatprep.mubr.f32.mxu0 0.0
  %v2666 = vand.u32 %v2008, 4294901760
  %2667 = vmatmul.mubr.f32.gmra.mrb[0].mxu0 %v2666
  %v2668 = vpop.f32.mrb[0].mxu0
  %v2669 = vadd.f32 %v2582, %v2668
  %v2670 = vpop.f32.mrb[0].mxu0
  %2671 = vdwg.mxu0
  %2672 = vst [vmem:[%s2] sm:$0xff] %v2669
  // Predicated region
  $region10: #{cnn_forward.1} parent=0 // pred_check
    _
  $region11: #{cnn_forward.1} parent=0 // pred_check_branch
    %2674 = sbr.rel (0) target = $region13
  $region12: #{cnn_forward.1} parent=0 // pred_region
    _
  $region13: #{cnn_forward.1} parent=0 // pred_fallthru
    _
  // Predicated region
  $region14: #{cnn_forward.1} parent=0 // pred_check
    _
  $region15: #{cnn_forward.1} parent=0 // pred_check_branch
    %2676 = sbr.rel (0) target = $region17
  $region16: #{cnn_forward.1} parent=0 // pred_region
    _
  $region17: #{cnn_forward.1} parent=0 // pred_fallthru
    _

</llo_original>
